<compile_context>
chip_gen: v7x
topology: tpu7x:2x2x1
jax: 0.10.0
libtpu: 0.0.40
codegen_flags: <defaults>
</compile_context>

<pallas_src>
import functools

import jax
import jax.numpy as jnp
from jax.experimental import pallas as pl
from jax.experimental.pallas import tpu as pltpu

EPS = 1e-5
MATMUL_DTYPE = jnp.bfloat16     # MXU operand dtype (f32 accumulation)
ACT_DTYPE = jnp.bfloat16        # HBM dtype of the o1 / ds intermediates
ACT_BYTES = 2


# --------------------------------------------------------------------------- #
# In-kernel helpers
# --------------------------------------------------------------------------- #
def _zero_pad_border(pad_ref, Bblk, H, W, C):
    """Zero only the 4 border stripes of the (Bblk, H+2, W+2, C) pad scratch.

    The border is never touched by the interior write, but scratch is not
    zero-initialised and with a "parallel" batch axis we cannot key off
    program_id == 0, so the (tiny) stripes are re-zeroed every step.
    """
    dt = pad_ref.dtype
    zrow = jnp.zeros((Bblk, 1, W + 2, C), dt)
    zcol = jnp.zeros((Bblk, H, 1, C), dt)
    pad_ref[:, pl.ds(0, 1), :, :] = zrow
    pad_ref[:, pl.ds(H + 1, 1), :, :] = zrow
    pad_ref[:, pl.ds(1, H), pl.ds(0, 1), :] = zcol
    pad_ref[:, pl.ds(1, H), pl.ds(W + 1, 1), :] = zcol


def _conv3x3_im2col(pad_ref, patch_ref, w_ref, Bblk, H, W, C):
    """3x3 'same' conv of the data already placed in pad_ref, as ONE matmul.

    pad_ref:   (Bblk, H+2, W+2, C) f32 scratch; border zero, interior = input.
    patch_ref: (Bblk*H*W, 9*C)     bf16 scratch (im2col matrix, MXU operand).
    w_ref:     (9*C, Nout)         bf16 weights.
    Returns (Bblk*H*W, Nout) float32.
    """
    for idx in range(9):                      # static unrolled: 9 shifted views
        dh, dw = idx // 3, idx % 3
        patch_ref[:, pl.ds(idx * C, C)] = (
            pad_ref[:, pl.ds(dh, H), pl.ds(dw, W), :]
            .reshape(Bblk * H * W, C).astype(patch_ref.dtype))
    # One MXU push with K = 9*C instead of nine K=C pushes; bf16 x bf16 -> f32.
    return jnp.dot(patch_ref[...], w_ref[...],
                   preferred_element_type=jnp.float32)


# --------------------------------------------------------------------------- #
# Stage 1: relu(bn1(x)) -> conv1 (+ fused 1x1 shortcut) + bn2 partial stats
# --------------------------------------------------------------------------- #
def _stage1_kernel(x_ref, s_ref, t_ref, w_ref, *rest,
                   Bblk, H, W, Cin, Cout, has_ds, fuse_ds):
    if has_ds and not fuse_ds:
        wd_ref = rest[0]
        rest = rest[1:]
    if has_ds:
        o1_ref, ds_ref, stat_ref, pad_ref, patch_ref = rest
    else:
        o1_ref, stat_ref, pad_ref, patch_ref = rest

    _zero_pad_border(pad_ref, Bblk, H, W, Cin)

    # bn1 (pre-folded batch scale/shift) + relu in f32.
    x = x_ref[...].astype(jnp.float32).reshape(Bblk * H * W, Cin)
    h = jnp.maximum(x * s_ref[...] + t_ref[...], 0.0)
    pad_ref[:, pl.ds(1, H), pl.ds(1, W), :] = h.reshape(Bblk, H, W, Cin)

    res = _conv3x3_im2col(pad_ref, patch_ref, w_ref, Bblk, H, W, Cin)

    if has_ds and fuse_ds:
        o1 = res[:, :Cout]          # conv1 columns
        ds = res[:, Cout:]          # centre-tap-embedded 1x1 shortcut columns
    elif has_ds:
        o1 = res
        ds = jnp.dot(h.astype(MATMUL_DTYPE), wd_ref[...],
                     preferred_element_type=jnp.float32)
    else:
        o1 = res

    # bn2 partial statistics over this block, in f32, before the bf16 store.
    ssum = jnp.sum(o1, axis=0, keepdims=True)           # (1, Cout)
    ssq = jnp.sum(o1 * o1, axis=0, keepdims=True)       # (1, Cout)
    stat_ref[...] = jnp.concatenate([ssum, ssq], axis=0).reshape(1, 2, Cout)

    o1_ref[...] = o1.reshape(Bblk, H, W, Cout).astype(o1_ref.dtype)
    if has_ds:
        ds_ref[...] = ds.reshape(Bblk, H, W, Cout).astype(ds_ref.dtype)


# --------------------------------------------------------------------------- #
# Stage 2: relu(bn2(o1)) -> conv2 -> + shortcut
# --------------------------------------------------------------------------- #
def _stage2_kernel(o1_ref, src_ref, s2_ref, t2_ref, w_ref, *rest,
                   Bblk, H, W, C, has_ds):
    if has_ds:
        out_ref, pad_ref, patch_ref = rest
    else:
        s1_ref, t1_ref, out_ref, pad_ref, patch_ref = rest

    _zero_pad_border(pad_ref, Bblk, H, W, C)

    o1 = o1_ref[...].astype(jnp.float32).reshape(Bblk * H * W, C)
    h2 = jnp.maximum(o1 * s2_ref[...] + t2_ref[...], 0.0)    # bn2 + relu
    pad_ref[:, pl.ds(1, H), pl.ds(1, W), :] = h2.reshape(Bblk, H, W, C)

    o2 = _conv3x3_im2col(pad_ref, patch_ref, w_ref, Bblk, H, W, C)

    if has_ds:
        sc = src_ref[...].astype(jnp.float32).reshape(Bblk * H * W, C)
    else:
        # Identity shortcut is applied to relu(bn1(x)); recompute it from x
        # instead of round-tripping a ds tensor through HBM.
        xv = src_ref[...].astype(jnp.float32).reshape(Bblk * H * W, C)
        sc = jnp.maximum(xv * s1_ref[...] + t1_ref[...], 0.0)

    out_ref[...] = (o2 + sc).reshape(Bblk, H, W, C).astype(out_ref.dtype)


# --------------------------------------------------------------------------- #
# Wrapper helpers
# --------------------------------------------------------------------------- #
def _vmem_capacity_bytes():
    try:
        return int(pltpu.get_tpu_info().vmem_capacity_bytes)
    except Exception:
        return 64 << 20       # v7x per-TensorCore capacity: the safe lower bound


def _scale_shift(mean, var, gamma, beta):
    inv = jax.lax.rsqrt(var + EPS)
    scale = gamma.astype(jnp.float32) * inv
    shift = beta.astype(jnp.float32) - mean * scale
    c = mean.shape[-1]
    return scale.reshape(1, c).astype(jnp.float32), \
        shift.reshape(1, c).astype(jnp.float32)


def _vmem_per_sample(H, W, Cin, Cout, has_ds):
    """Per-batch-sample VMEM bytes: double-buffered in/out blocks + scratch."""
    F32, BF16 = 4, 2
    s1 = (2 * H * W * Cin * F32                              # x in
          + 2 * H * W * Cout * ACT_BYTES * (2 if has_ds else 1)   # o1 (+ds) out
          + (H + 2) * (W + 2) * Cin * F32                    # pad scratch
          + H * W * 9 * Cin * BF16)                          # patch scratch
    s2 = (2 * H * W * Cout * ACT_BYTES                       # o1 in
          + 2 * H * W * (Cout if has_ds else Cin) * (ACT_BYTES if has_ds else F32)
          + 2 * H * W * Cout * F32                           # out
          + (H + 2) * (W + 2) * Cout * F32
          + H * W * 9 * Cout * BF16)
    return max(s1, s2)


def _pick_bblk(N, per_sample_bytes, budget_bytes):
    divisors = [d for d in range(1, N + 1) if N % d == 0]
    fits = [d for d in divisors if d * per_sample_bytes <= budget_bytes] or [1]
    # Keep the grid extent >= 2 when N allows so both v7x TensorCores get work;
    # on v5e/v6e (1 TC) the extra grid step only costs ~0.35us, negligible here.
    pref = [d for d in fits if N // d >= 2]
    return max(pref) if pref else max(fits)


# --------------------------------------------------------------------------- #
# Forward
# --------------------------------------------------------------------------- #
def preact_block_forward(x_nchw, params, *, stride=1):
    """NCHW in / NCHW out. BN batch stats folded into per-channel scale/shift;
    conv work runs in two batch-blocked Pallas kernels ('parallel' grid)."""
    assert stride == 1, "only stride=1 is implemented in-kernel"
    x = jnp.transpose(x_nchw, (0, 2, 3, 1)).astype(jnp.float32)   # NCHW -> NHWC
    N, H, W, Cin = x.shape
    w1, w2 = params["w1"], params["w2"]                           # HWIO
    Cout = w1.shape[-1]
    wd = params.get("wd")
    has_ds = wd is not None
    if not has_ds:
        assert Cin == Cout, "identity shortcut requires in_planes == planes"

    # Fuse the 1x1 shortcut into conv1's matmul when 2*Cout still fits the MXU
    # N dimension (256 on v6e/v7x; harmless smaller on v5e at these widths).
    fuse_ds = has_ds and (2 * Cout <= 256)

    w1m = w1.reshape(9 * Cin, Cout).astype(jnp.float32)
    if fuse_ds:
        wd_embed = jnp.zeros((9 * Cin, Cout), jnp.float32)
        wd_embed = wd_embed.at[4 * Cin:5 * Cin, :].set(wd.astype(jnp.float32))
        w1m = jnp.concatenate([w1m, wd_embed], axis=1)            # [conv1 | ds]
    w1r = w1m.astype(MATMUL_DTYPE)
    w2r = w2.reshape(9 * Cout, Cout).astype(MATMUL_DTYPE)
    w1cols = int(w1r.shape[1])

    # bn1 statistics: cheap XLA pre-pass, centred (two-pass) variance.
    m1 = jnp.mean(x, axis=(0, 1, 2))
    v1 = jnp.mean((x - m1) ** 2, axis=(0, 1, 2))
    s1, t1 = _scale_shift(m1, v1, params["g1"], params["b1"])

    # ----- tiling / VMEM budget (per generation) --------------------------- #
    vmem_cap = _vmem_capacity_bytes()
    per_sample = _vmem_per_sample(H, W, Cin, Cout, has_ds)
    fixed = 512 * 1024                       # weights, scale/shift, stats, slack
    budget = max(int(0.40 * vmem_cap) - fixed, per_sample)
    Bblk = _pick_bblk(N, per_sample, budget)
    G = N // Bblk
    R = N * H * W
    vmem_limit = int(min(int(0.75 * vmem_cap),
                         max(2 * (Bblk * per_sample + fixed), 8 << 20)))

    blk_img = lambda c: pl.BlockSpec((Bblk, H, W, c), lambda n: (n, 0, 0, 0))
    blk_vec = lambda c: pl.BlockSpec((1, c), lambda n: (0, 0))
    blk_mat = lambda a, b: pl.BlockSpec((a, b), lambda n: (0, 0))

    # ---------------- stage 1: bn1+relu -> conv1 (+ shortcut) -------------- #
    in_specs1 = [blk_img(Cin), blk_vec(Cin), blk_vec(Cin),
                 blk_mat(9 * Cin, w1cols)]
    args1 = [x, s1, t1, w1r]
    if has_ds and not fuse_ds:
        in_specs1.append(blk_mat(Cin, Cout))
        args1.append(wd.astype(MATMUL_DTYPE))

    out_shapes1 = [jax.ShapeDtypeStruct((N, H, W, Cout), ACT_DTYPE)]
    out_specs1 = [blk_img(Cout)]
    if has_ds:
        out_shapes1.append(jax.ShapeDtypeStruct((N, H, W, Cout), ACT_DTYPE))
        out_specs1.append(blk_img(Cout))
    out_shapes1.append(jax.ShapeDtypeStruct((G, 2, Cout), jnp.float32))
    out_specs1.append(pl.BlockSpec((1, 2, Cout), lambda n: (n, 0, 0)))

    flops1 = (2 * R * 9 * Cin * w1cols
              + (2 * R * Cin * Cout if (has_ds and not fuse_ds) else 0)
              + 3 * R * Cin + 4 * R * Cout)
    bytes1 = (4 * R * Cin + ACT_BYTES * R * Cout * (2 if has_ds else 1)
              + 2 * 9 * Cin * w1cols + 4 * (G * 2 * Cout + 4 * Cin))

    kernel1 = functools.partial(_stage1_kernel, Bblk=Bblk, H=H, W=W, Cin=Cin,
                                Cout=Cout, has_ds=has_ds, fuse_ds=fuse_ds)
    outs1 = pl.pallas_call(
        kernel1,
        out_shape=tuple(out_shapes1),
        grid=(G,),
        in_specs=in_specs1,
        out_specs=tuple(out_specs1),
        scratch_shapes=[pltpu.VMEM((Bblk, H + 2, W + 2, Cin), jnp.float32),
                        pltpu.VMEM((Bblk * H * W, 9 * Cin), MATMUL_DTYPE)],
        compiler_params=pltpu.CompilerParams(
            dimension_semantics=("parallel",),
            vmem_limit_bytes=vmem_limit),
        cost_estimate=pl.CostEstimate(flops=int(flops1), transcendentals=0,
                                      bytes_accessed=int(bytes1)),
    )(*args1)

    if has_ds:
        o1, ds, stats = outs1
    else:
        o1, stats = outs1
        ds = None

    # bn2 statistics from the tiny per-block partial sums (no extra o1 pass).
    sum_o1 = jnp.sum(stats[:, 0, :], axis=0)
    sumsq_o1 = jnp.sum(stats[:, 1, :], axis=0)
    m2 = sum_o1 / R
    v2 = jnp.maximum(sumsq_o1 / R - m2 * m2, 0.0)
    s2, t2 = _scale_shift(m2, v2, params["g2"], params["b2"])

    # ---------------- stage 2: bn2+relu -> conv2 -> + shortcut ------------- #
    args2 = [o1, ds if has_ds else x, s2, t2, w2r]
    in_specs2 = [blk_img(Cout), blk_img(Cout if has_ds else Cin),
                 blk_vec(Cout), blk_vec(Cout), blk_mat(9 * Cout, Cout)]
    if not has_ds:
        args2 += [s1, t1]
        in_specs2 += [blk_vec(Cin), blk_vec(Cin)]

    flops2 = (2 * R * 9 * Cout * Cout + 4 * R * Cout
              + (3 * R * Cout if not has_ds else 0))
    bytes2 = (ACT_BYTES * R * Cout
              + (ACT_BYTES if has_ds else 4) * R * (Cout if has_ds else Cin)
              + 4 * R * Cout + 2 * 9 * Cout * Cout + 4 * 4 * Cout)

    kernel2 = functools.partial(_stage2_kernel, Bblk=Bblk, H=H, W=W, C=Cout,
                                has_ds=has_ds)
    out_nhwc = pl.pallas_call(
        kernel2,
        out_shape=jax.ShapeDtypeStruct((N, H, W, Cout), jnp.float32),
        grid=(G,),
        in_specs=in_specs2,
        out_specs=blk_img(Cout),
        scratch_shapes=[pltpu.VMEM((Bblk, H + 2, W + 2, Cout), jnp.float32),
                        pltpu.VMEM((Bblk * H * W, 9 * Cout), MATMUL_DTYPE)],
        compiler_params=pltpu.CompilerParams(
            dimension_semantics=("parallel",),
            vmem_limit_bytes=vmem_limit),
        cost_estimate=pl.CostEstimate(flops=int(flops2), transcendentals=0,
                                      bytes_accessed=int(bytes2)),
    )(*args2)

    return jnp.transpose(out_nhwc, (0, 3, 1, 2))                  # NHWC -> NCHW


# --------------------------------------------------------------------------- #
# Pure-JAX reference (same math, XLA convs, f32) for the correctness check
# --------------------------------------------------------------------------- #
def preact_block_reference(x_nchw, params):
    x = jnp.transpose(x_nchw, (0, 2, 3, 1)).astype(jnp.float32)

    def bn_relu(t, g, b):
        mean = t.mean(axis=(0, 1, 2), keepdims=True)
        var = ((t - mean) ** 2).mean(axis=(0, 1, 2), keepdims=True)
        return jnp.maximum((t - mean) * jax.lax.rsqrt(var + EPS) * g + b, 0.0)

    conv = lambda t, w: jax.lax.conv_general_dilated(
        t, w, (1, 1), "SAME", dimension_numbers=("NHWC", "HWIO", "NHWC"),
        precision=jax.lax.Precision.HIGHEST)

    h = bn_relu(x, params["g1"], params["b1"])
    wd = params.get("wd")
    ds = h if wd is None else jnp.einsum(
        "nhwc,cd->nhwd", h, wd, precision=jax.lax.Precision.HIGHEST)
    o1 = conv(h, params["w1"])
    h2 = bn_relu(o1, params["g2"], params["b2"])
    o2 = conv(h2, params["w2"])
    return jnp.transpose(o2 + ds, (0, 3, 1, 2))


# --------------------------------------------------------------------------- #
# Demo / correctness check
# --------------------------------------------------------------------------- #
if __name__ == "__main__":
    def make_params(key, cin, planes, with_downsample):
        ks = jax.random.split(key, 7)
        p = {
            "g1": 1.0 + 0.1 * jax.random.normal(ks[0], (cin,), jnp.float32),
            "b1": 0.1 * jax.random.normal(ks[1], (cin,), jnp.float32),
            "w1": 0.1 * jax.random.normal(ks[2], (3, 3, cin, planes), jnp.float32),
            "g2": 1.0 + 0.1 * jax.random.normal(ks[3], (planes,), jnp.float32),
            "b2": 0.1 * jax.random.normal(ks[4], (planes,), jnp.float32),
            "w2": 0.1 * jax.random.normal(ks[5], (3, 3, planes, planes),
                                          jnp.float32),
        }
        if with_downsample:
            p["wd"] = 0.1 * jax.random.normal(ks[6], (cin, planes), jnp.float32)
        return p

    key = jax.random.PRNGKey(0)
    k_x1, k_p1, k_x2, k_p2 = jax.random.split(key, 4)

    # Tolerance accounts for bf16 MXU operands and bf16 HBM intermediates
    # against an all-f32 HIGHEST-precision reference.
    TOL = 1e-1

    # Case 1: PreActBlock(in_planes=4, planes=8) -> 1x1-conv downsample path
    # (fused into the conv1 matmul).
    N, Cin, H, W, planes = 2, 4, 16, 16, 8
    x1 = jax.random.normal(k_x1, (N, Cin, H, W), jnp.float32)        # NCHW
    p1 = make_params(k_p1, Cin, planes, with_downsample=True)
    out1 = jax.block_until_ready(preact_block_forward(x1, p1))
    assert out1.shape == (N, planes, H, W)
    err1 = float(jnp.max(jnp.abs(out1 - preact_block_reference(x1, p1))))
    assert err1 < TOL, f"downsample path: max abs error {err1}"

    # Case 2: PreActBlock(in_planes=8, planes=8) -> identity shortcut
    # (empty nn.Sequential applied to relu(bn1(x)); ds never materialized).
    x2 = jax.random.normal(k_x2, (N, planes, H, W), jnp.float32)
    p2 = make_params(k_p2, planes, planes, with_downsample=False)
    out2 = jax.block_until_ready(preact_block_forward(x2, p2))
    assert out2.shape == (N, planes, H, W)
    err2 = float(jnp.max(jnp.abs(out2 - preact_block_reference(x2, p2))))
    assert err2 < TOL, f"identity path: max abs error {err2}"

    print("KERNEL_OK")
</pallas_src>

<mosaic_0001>
module attributes {stable_mosaic.version = 11 : i64} {
  func.func @_stage1_kernel(%arg0: i32, %arg1: memref<1x16x16x4xf32, #tpu.memory_space<vmem>>, %arg2: memref<1x4xf32, #tpu.memory_space<vmem>>, %arg3: memref<1x4xf32, #tpu.memory_space<vmem>>, %arg4: memref<36x16xbf16, #tpu.memory_space<vmem>>, %arg5: memref<1x16x16x8xbf16, #tpu.memory_space<vmem>>, %arg6: memref<1x16x16x8xbf16, #tpu.memory_space<vmem>>, %arg7: memref<1x2x8xf32, #tpu.memory_space<vmem>>, %arg8: memref<1x18x18x4xf32, #tpu.memory_space<vmem>>, %arg9: memref<256x36xbf16, #tpu.memory_space<vmem>>) attributes {dimension_semantics = [#tpu.dimension_semantics<parallel>], iteration_bounds = array<i64: 2>, scalar_prefetch = 0 : i64, scratch_operands = 2 : i64, tpu.core_type = #tpu.core_type<tc>, window_params = [{transform_indices = @transform_0, window_bounds = array<i64: 1, 16, 16, 4>}, {pipeline_mode = #tpu.pipeline_mode<synchronous>, transform_indices = @transform_1, window_bounds = array<i64: 1, 4>}, {pipeline_mode = #tpu.pipeline_mode<synchronous>, transform_indices = @transform_2, window_bounds = array<i64: 1, 4>}, {pipeline_mode = #tpu.pipeline_mode<synchronous>, transform_indices = @transform_3, window_bounds = array<i64: 36, 16>}, {transform_indices = @transform_4, window_bounds = array<i64: 1, 16, 16, 8>}, {transform_indices = @transform_5, window_bounds = array<i64: 1, 16, 16, 8>}, {transform_indices = @transform_6, window_bounds = array<i64: 1, 2, 8>}]} {
    %cst = arith.constant 0.000000e+00 : f32
    %0 = vector.broadcast %cst : f32 to vector<1x1x18x4xf32>
    %cst_0 = arith.constant 0.000000e+00 : f32
    %1 = vector.broadcast %cst_0 : f32 to vector<1x16x1x4xf32>
    %c0 = arith.constant 0 : index
    %c0_1 = arith.constant 0 : index
    %c0_2 = arith.constant 0 : index
    %c0_3 = arith.constant 0 : index
    %2 = vector.load %arg8[%c0, %c0_1, %c0_2, %c0_3] : memref<1x18x18x4xf32, #tpu.memory_space<vmem>>, vector<1x1x18x4xf32>
    tpu.vector_store %arg8[%c0, %c0_1, %c0_2, %c0_3], %0 {strides = array<i32>} : memref<1x18x18x4xf32, #tpu.memory_space<vmem>>, vector<1x1x18x4xf32>,
    %c0_4 = arith.constant 0 : index
    %c17 = arith.constant 17 : index
    %c0_5 = arith.constant 0 : index
    %c0_6 = arith.constant 0 : index
    %3 = vector.load %arg8[%c0_4, %c17, %c0_5, %c0_6] : memref<1x18x18x4xf32, #tpu.memory_space<vmem>>, vector<1x1x18x4xf32>
    tpu.vector_store %arg8[%c0_4, %c17, %c0_5, %c0_6], %0 {strides = array<i32>} : memref<1x18x18x4xf32, #tpu.memory_space<vmem>>, vector<1x1x18x4xf32>,
    %c0_7 = arith.constant 0 : index
    %c1 = arith.constant 1 : index
    %c0_8 = arith.constant 0 : index
    %c0_9 = arith.constant 0 : index
    %4 = vector.load %arg8[%c0_7, %c1, %c0_8, %c0_9] : memref<1x18x18x4xf32, #tpu.memory_space<vmem>>, vector<1x16x1x4xf32>
    tpu.vector_store %arg8[%c0_7, %c1, %c0_8, %c0_9], %1 {strides = array<i32>} : memref<1x18x18x4xf32, #tpu.memory_space<vmem>>, vector<1x16x1x4xf32>,
    %c0_10 = arith.constant 0 : index
    %c1_11 = arith.constant 1 : index
    %c17_12 = arith.constant 17 : index
    %c0_13 = arith.constant 0 : index
    %5 = vector.load %arg8[%c0_10, %c1_11, %c17_12, %c0_13] : memref<1x18x18x4xf32, #tpu.memory_space<vmem>>, vector<1x16x1x4xf32>
    tpu.vector_store %arg8[%c0_10, %c1_11, %c17_12, %c0_13], %1 {strides = array<i32>} : memref<1x18x18x4xf32, #tpu.memory_space<vmem>>, vector<1x16x1x4xf32>,
    %c0_14 = arith.constant 0 : index
    %c0_15 = arith.constant 0 : index
    %c0_16 = arith.constant 0 : index
    %c0_17 = arith.constant 0 : index
    %6 = vector.load %arg1[%c0_14, %c0_15, %c0_16, %c0_17] : memref<1x16x16x4xf32, #tpu.memory_space<vmem>>, vector<1x16x16x4xf32>
    %7 = vector.shape_cast %6 : vector<1x16x16x4xf32> to vector<256x4xf32>
    %c0_18 = arith.constant 0 : index
    %c0_19 = arith.constant 0 : index
    %8 = vector.load %arg2[%c0_18, %c0_19] : memref<1x4xf32, #tpu.memory_space<vmem>>, vector<1x4xf32>
    %9 = vector.broadcast %8 : vector<1x4xf32> to vector<256x4xf32>
    %10 = arith.mulf %7, %9 : vector<256x4xf32>
    %c0_20 = arith.constant 0 : index
    %c0_21 = arith.constant 0 : index
    %11 = vector.load %arg3[%c0_20, %c0_21] : memref<1x4xf32, #tpu.memory_space<vmem>>, vector<1x4xf32>
    %12 = vector.broadcast %11 : vector<1x4xf32> to vector<256x4xf32>
    %13 = arith.addf %10, %12 : vector<256x4xf32>
    %cst_22 = arith.constant 0.000000e+00 : f32
    %14 = vector.broadcast %cst_22 : f32 to vector<256x4xf32>
    %15 = arith.maximumf %13, %14 : vector<256x4xf32>
    %16 = vector.shape_cast %15 : vector<256x4xf32> to vector<1x16x16x4xf32>
    %c0_23 = arith.constant 0 : index
    %c1_24 = arith.constant 1 : index
    %c1_25 = arith.constant 1 : index
    %c0_26 = arith.constant 0 : index
    %17 = vector.load %arg8[%c0_23, %c1_24, %c1_25, %c0_26] : memref<1x18x18x4xf32, #tpu.memory_space<vmem>>, vector<1x16x16x4xf32>
    tpu.vector_store %arg8[%c0_23, %c1_24, %c1_25, %c0_26], %16 {strides = array<i32>} : memref<1x18x18x4xf32, #tpu.memory_space<vmem>>, vector<1x16x16x4xf32>,
    %c0_27 = arith.constant 0 : index
    %c0_28 = arith.constant 0 : index
    %c0_29 = arith.constant 0 : index
    %c0_30 = arith.constant 0 : index
    %18 = vector.load %arg8[%c0_27, %c0_28, %c0_29, %c0_30] : memref<1x18x18x4xf32, #tpu.memory_space<vmem>>, vector<1x16x16x4xf32>
    %19 = vector.shape_cast %18 : vector<1x16x16x4xf32> to vector<256x4xf32>
    %20 = arith.truncf %19 : vector<256x4xf32> to vector<256x4xbf16>
    %c0_31 = arith.constant 0 : index
    %c0_32 = arith.constant 0 : index
    %21 = vector.load %arg9[%c0_31, %c0_32] : memref<256x36xbf16, #tpu.memory_space<vmem>>, vector<256x4xbf16>
    tpu.vector_store %arg9[%c0_31, %c0_32], %20 {strides = array<i32>} : memref<256x36xbf16, #tpu.memory_space<vmem>>, vector<256x4xbf16>,
    %c0_33 = arith.constant 0 : index
    %c0_34 = arith.constant 0 : index
    %c1_35 = arith.constant 1 : index
    %c0_36 = arith.constant 0 : index
    %22 = vector.load %arg8[%c0_33, %c0_34, %c1_35, %c0_36] : memref<1x18x18x4xf32, #tpu.memory_space<vmem>>, vector<1x16x16x4xf32>
    %23 = vector.shape_cast %22 : vector<1x16x16x4xf32> to vector<256x4xf32>
    %24 = arith.truncf %23 : vector<256x4xf32> to vector<256x4xbf16>
    %c0_37 = arith.constant 0 : index
    %c4 = arith.constant 4 : index
    %25 = vector.load %arg9[%c0_37, %c4] : memref<256x36xbf16, #tpu.memory_space<vmem>>, vector<256x4xbf16>
    tpu.vector_store %arg9[%c0_37, %c4], %24 {strides = array<i32>} : memref<256x36xbf16, #tpu.memory_space<vmem>>, vector<256x4xbf16>,
    %c0_38 = arith.constant 0 : index
    %c0_39 = arith.constant 0 : index
    %c2 = arith.constant 2 : index
    %c0_40 = arith.constant 0 : index
    %26 = vector.load %arg8[%c0_38, %c0_39, %c2, %c0_40] : memref<1x18x18x4xf32, #tpu.memory_space<vmem>>, vector<1x16x16x4xf32>
    %27 = vector.shape_cast %26 : vector<1x16x16x4xf32> to vector<256x4xf32>
    %28 = arith.truncf %27 : vector<256x4xf32> to vector<256x4xbf16>
    %c0_41 = arith.constant 0 : index
    %c8 = arith.constant 8 : index
    %29 = vector.load %arg9[%c0_41, %c8] : memref<256x36xbf16, #tpu.memory_space<vmem>>, vector<256x4xbf16>
    tpu.vector_store %arg9[%c0_41, %c8], %28 {strides = array<i32>} : memref<256x36xbf16, #tpu.memory_space<vmem>>, vector<256x4xbf16>,
    %c0_42 = arith.constant 0 : index
    %c1_43 = arith.constant 1 : index
    %c0_44 = arith.constant 0 : index
    %c0_45 = arith.constant 0 : index
    %30 = vector.load %arg8[%c0_42, %c1_43, %c0_44, %c0_45] : memref<1x18x18x4xf32, #tpu.memory_space<vmem>>, vector<1x16x16x4xf32>
    %31 = vector.shape_cast %30 : vector<1x16x16x4xf32> to vector<256x4xf32>
    %32 = arith.truncf %31 : vector<256x4xf32> to vector<256x4xbf16>
    %c0_46 = arith.constant 0 : index
    %c12 = arith.constant 12 : index
    %33 = vector.load %arg9[%c0_46, %c12] : memref<256x36xbf16, #tpu.memory_space<vmem>>, vector<256x4xbf16>
    tpu.vector_store %arg9[%c0_46, %c12], %32 {strides = array<i32>} : memref<256x36xbf16, #tpu.memory_space<vmem>>, vector<256x4xbf16>,
    %c0_47 = arith.constant 0 : index
    %c1_48 = arith.constant 1 : index
    %c1_49 = arith.constant 1 : index
    %c0_50 = arith.constant 0 : index
    %34 = vector.load %arg8[%c0_47, %c1_48, %c1_49, %c0_50] : memref<1x18x18x4xf32, #tpu.memory_space<vmem>>, vector<1x16x16x4xf32>
    %35 = vector.shape_cast %34 : vector<1x16x16x4xf32> to vector<256x4xf32>
    %36 = arith.truncf %35 : vector<256x4xf32> to vector<256x4xbf16>
    %c0_51 = arith.constant 0 : index
    %c16 = arith.constant 16 : index
    %37 = vector.load %arg9[%c0_51, %c16] : memref<256x36xbf16, #tpu.memory_space<vmem>>, vector<256x4xbf16>
    tpu.vector_store %arg9[%c0_51, %c16], %36 {strides = array<i32>} : memref<256x36xbf16, #tpu.memory_space<vmem>>, vector<256x4xbf16>,
    %c0_52 = arith.constant 0 : index
    %c1_53 = arith.constant 1 : index
    %c2_54 = arith.constant 2 : index
    %c0_55 = arith.constant 0 : index
    %38 = vector.load %arg8[%c0_52, %c1_53, %c2_54, %c0_55] : memref<1x18x18x4xf32, #tpu.memory_space<vmem>>, vector<1x16x16x4xf32>
    %39 = vector.shape_cast %38 : vector<1x16x16x4xf32> to vector<256x4xf32>
    %40 = arith.truncf %39 : vector<256x4xf32> to vector<256x4xbf16>
    %c0_56 = arith.constant 0 : index
    %c20 = arith.constant 20 : index
    %41 = vector.load %arg9[%c0_56, %c20] : memref<256x36xbf16, #tpu.memory_space<vmem>>, vector<256x4xbf16>
    tpu.vector_store %arg9[%c0_56, %c20], %40 {strides = array<i32>} : memref<256x36xbf16, #tpu.memory_space<vmem>>, vector<256x4xbf16>,
    %c0_57 = arith.constant 0 : index
    %c2_58 = arith.constant 2 : index
    %c0_59 = arith.constant 0 : index
    %c0_60 = arith.constant 0 : index
    %42 = vector.load %arg8[%c0_57, %c2_58, %c0_59, %c0_60] : memref<1x18x18x4xf32, #tpu.memory_space<vmem>>, vector<1x16x16x4xf32>
    %43 = vector.shape_cast %42 : vector<1x16x16x4xf32> to vector<256x4xf32>
    %44 = arith.truncf %43 : vector<256x4xf32> to vector<256x4xbf16>
    %c0_61 = arith.constant 0 : index
    %c24 = arith.constant 24 : index
    %45 = vector.load %arg9[%c0_61, %c24] : memref<256x36xbf16, #tpu.memory_space<vmem>>, vector<256x4xbf16>
    tpu.vector_store %arg9[%c0_61, %c24], %44 {strides = array<i32>} : memref<256x36xbf16, #tpu.memory_space<vmem>>, vector<256x4xbf16>,
    %c0_62 = arith.constant 0 : index
    %c2_63 = arith.constant 2 : index
    %c1_64 = arith.constant 1 : index
    %c0_65 = arith.constant 0 : index
    %46 = vector.load %arg8[%c0_62, %c2_63, %c1_64, %c0_65] : memref<1x18x18x4xf32, #tpu.memory_space<vmem>>, vector<1x16x16x4xf32>
    %47 = vector.shape_cast %46 : vector<1x16x16x4xf32> to vector<256x4xf32>
    %48 = arith.truncf %47 : vector<256x4xf32> to vector<256x4xbf16>
    %c0_66 = arith.constant 0 : index
    %c28 = arith.constant 28 : index
    %49 = vector.load %arg9[%c0_66, %c28] : memref<256x36xbf16, #tpu.memory_space<vmem>>, vector<256x4xbf16>
    tpu.vector_store %arg9[%c0_66, %c28], %48 {strides = array<i32>} : memref<256x36xbf16, #tpu.memory_space<vmem>>, vector<256x4xbf16>,
    %c0_67 = arith.constant 0 : index
    %c2_68 = arith.constant 2 : index
    %c2_69 = arith.constant 2 : index
    %c0_70 = arith.constant 0 : index
    %50 = vector.load %arg8[%c0_67, %c2_68, %c2_69, %c0_70] : memref<1x18x18x4xf32, #tpu.memory_space<vmem>>, vector<1x16x16x4xf32>
    %51 = vector.shape_cast %50 : vector<1x16x16x4xf32> to vector<256x4xf32>
    %52 = arith.truncf %51 : vector<256x4xf32> to vector<256x4xbf16>
    %c0_71 = arith.constant 0 : index
    %c32 = arith.constant 32 : index
    %53 = vector.load %arg9[%c0_71, %c32] : memref<256x36xbf16, #tpu.memory_space<vmem>>, vector<256x4xbf16>
    tpu.vector_store %arg9[%c0_71, %c32], %52 {strides = array<i32>} : memref<256x36xbf16, #tpu.memory_space<vmem>>, vector<256x4xbf16>,
    %c0_72 = arith.constant 0 : index
    %c0_73 = arith.constant 0 : index
    %54 = vector.load %arg9[%c0_72, %c0_73] : memref<256x36xbf16, #tpu.memory_space<vmem>>, vector<256x36xbf16>
    %c0_74 = arith.constant 0 : index
    %c0_75 = arith.constant 0 : index
    %55 = vector.load %arg4[%c0_74, %c0_75] : memref<36x16xbf16, #tpu.memory_space<vmem>>, vector<36x16xbf16>
    %cst_76 = arith.constant dense<0.000000e+00> : vector<256x16xf32>
    %56 = tpu.matmul %54, %55, %cst_76 {dimension_numbers = #tpu.dot_dimension_numbers<[1], [0], [0], [1], [0, 0, 1, 1], [], []>} : vector<256x36xbf16>, vector<36x16xbf16>, vector<256x16xf32> -> vector<256x16xf32>
    %57 = vector.extract_strided_slice %56 {offsets = [0, 0], sizes = [256, 8], strides = [1, 1]} : vector<256x16xf32> to vector<256x8xf32>
    %58 = vector.extract_strided_slice %56 {offsets = [0, 8], sizes = [256, 8], strides = [1, 1]} : vector<256x16xf32> to vector<256x8xf32>
    %cst_77 = arith.constant dense<0.000000e+00> : vector<8xf32>
    %59 = vector.multi_reduction <add>, %57, %cst_77 [0] : vector<256x8xf32> to vector<8xf32>
    %60 = vector.shape_cast %59 : vector<8xf32> to vector<1x8xf32>
    %61 = arith.mulf %57, %57 : vector<256x8xf32>
    %cst_78 = arith.constant dense<0.000000e+00> : vector<8xf32>
    %62 = vector.multi_reduction <add>, %61, %cst_78 [0] : vector<256x8xf32> to vector<8xf32>
    %63 = vector.shape_cast %62 : vector<8xf32> to vector<1x8xf32>
    %64 = tpu.concatenate %60, %63 in 0 : vector<1x8xf32>, vector<1x8xf32> -> vector<2x8xf32>
    %65 = vector.shape_cast %64 : vector<2x8xf32> to vector<1x2x8xf32>
    %c0_79 = arith.constant 0 : index
    %c0_80 = arith.constant 0 : index
    %c0_81 = arith.constant 0 : index
    %66 = vector.load %arg7[%c0_79, %c0_80, %c0_81] : memref<1x2x8xf32, #tpu.memory_space<vmem>>, vector<1x2x8xf32>
    tpu.vector_store %arg7[%c0_79, %c0_80, %c0_81], %65 {strides = array<i32>} : memref<1x2x8xf32, #tpu.memory_space<vmem>>, vector<1x2x8xf32>,
    %67 = vector.shape_cast %57 : vector<256x8xf32> to vector<1x16x16x8xf32>
    %68 = arith.truncf %67 : vector<1x16x16x8xf32> to vector<1x16x16x8xbf16>
    %c0_82 = arith.constant 0 : index
    %c0_83 = arith.constant 0 : index
    %c0_84 = arith.constant 0 : index
    %c0_85 = arith.constant 0 : index
    %69 = vector.load %arg5[%c0_82, %c0_83, %c0_84, %c0_85] : memref<1x16x16x8xbf16, #tpu.memory_space<vmem>>, vector<1x16x16x8xbf16>
    tpu.vector_store %arg5[%c0_82, %c0_83, %c0_84, %c0_85], %68 {strides = array<i32>} : memref<1x16x16x8xbf16, #tpu.memory_space<vmem>>, vector<1x16x16x8xbf16>,
    %70 = vector.shape_cast %58 : vector<256x8xf32> to vector<1x16x16x8xf32>
    %71 = arith.truncf %70 : vector<1x16x16x8xf32> to vector<1x16x16x8xbf16>
    %c0_86 = arith.constant 0 : index
    %c0_87 = arith.constant 0 : index
    %c0_88 = arith.constant 0 : index
    %c0_89 = arith.constant 0 : index
    %72 = vector.load %arg6[%c0_86, %c0_87, %c0_88, %c0_89] : memref<1x16x16x8xbf16, #tpu.memory_space<vmem>>, vector<1x16x16x8xbf16>
    tpu.vector_store %arg6[%c0_86, %c0_87, %c0_88, %c0_89], %71 {strides = array<i32>} : memref<1x16x16x8xbf16, #tpu.memory_space<vmem>>, vector<1x16x16x8xbf16>,
    return
  }
  func.func @transform_0(%arg0: i32) -> (i32, i32, i32, i32) {
    %c0_i32 = arith.constant 0 : i32
    %c0_i32_0 = arith.constant 0 : i32
    %c0_i32_1 = arith.constant 0 : i32
    %c0_i32_2 = arith.constant 0 : i32
    return %arg0, %c0_i32, %c0_i32_0, %c0_i32_1 : i32, i32, i32, i32
  }
  func.func @transform_1(%arg0: i32) -> (i32, i32) {
    %c0_i32 = arith.constant 0 : i32
    %c0_i32_0 = arith.constant 0 : i32
    %c0_i32_1 = arith.constant 0 : i32
    return %c0_i32, %c0_i32_0 : i32, i32
  }
  func.func @transform_2(%arg0: i32) -> (i32, i32) {
    %c0_i32 = arith.constant 0 : i32
    %c0_i32_0 = arith.constant 0 : i32
    %c0_i32_1 = arith.constant 0 : i32
    return %c0_i32, %c0_i32_0 : i32, i32
  }
  func.func @transform_3(%arg0: i32) -> (i32, i32) {
    %c0_i32 = arith.constant 0 : i32
    %c0_i32_0 = arith.constant 0 : i32
    %c0_i32_1 = arith.constant 0 : i32
    return %c0_i32, %c0_i32_0 : i32, i32
  }
  func.func @transform_4(%arg0: i32) -> (i32, i32, i32, i32) {
    %c0_i32 = arith.constant 0 : i32
    %c0_i32_0 = arith.constant 0 : i32
    %c0_i32_1 = arith.constant 0 : i32
    %c0_i32_2 = arith.constant 0 : i32
    return %arg0, %c0_i32, %c0_i32_0, %c0_i32_1 : i32, i32, i32, i32
  }
  func.func @transform_5(%arg0: i32) -> (i32, i32, i32, i32) {
    %c0_i32 = arith.constant 0 : i32
    %c0_i32_0 = arith.constant 0 : i32
    %c0_i32_1 = arith.constant 0 : i32
    %c0_i32_2 = arith.constant 0 : i32
    return %arg0, %c0_i32, %c0_i32_0, %c0_i32_1 : i32, i32, i32, i32
  }
  func.func @transform_6(%arg0: i32) -> (i32, i32, i32) {
    %c0_i32 = arith.constant 0 : i32
    %c0_i32_0 = arith.constant 0 : i32
    %c0_i32_1 = arith.constant 0 : i32
    return %arg0, %c0_i32, %c0_i32_0 : i32, i32, i32
  }
}

</mosaic_0001>

<llo_original>
// kernel: tpu_custom_call.1
$region0: #{tpu_custom_call.1}
  #allocation0 [shape = 'u32[]', space=smem, size = 0x4, offset = 0x4, fixed_abs, tag = 'smem constant byte address 0x4 - core index']
  #allocation1 [shape = 'u32[144,128]{1,0:T(1,128)}', space=vmem, size = 0x12000, scoped, tag = 'internal scratch']
  #allocation2 [shape = 'f32[1,18,18,4]{3,2,1,0:T(8,128)}', space=vmem, size = 0x36000, scoped, tag = 'scratch operand']
  #allocation3 [shape = 'bf16[256,36]{1,0:T(16,128)(2,1)}', space=vmem, size = 0x10000, scoped, tag = 'scratch operand']
  %s0 = inlined_call_operand.vmem [shape: f32[2,16,16,4], index: 0, kind: input, shape index: {}]
  %s1 = inlined_call_operand.vmem [shape: f32[1,4], index: 1, kind: input, shape index: {}]
  %s2 = inlined_call_operand.vmem [shape: f32[1,4], index: 2, kind: input, shape index: {}]
  %s3 = inlined_call_operand.vmem [shape: bf16[36,16], index: 3, kind: input, shape index: {}]
  %s4 = inlined_call_operand.vmem [shape: bf16[2,16,16,8], index: 4, kind: output, shape index: {0}]
  %s5 = inlined_call_operand.vmem [shape: bf16[2,16,16,8], index: 5, kind: output, shape index: {1}]
  %s6 = inlined_call_operand.hbm [shape: f32[2,2,8], index: 6, kind: output, shape index: {2}]
  %7 = xla_tuple %s4, %s5, %s6
  %s8 = sld [smem:[#allocation0]]
  $region65: #{tpu_custom_call.1} parent=0
    _
  %s10 = ssub.s32 1, %s8
  %s11 = scalar_select 0, %s10, %s8
  $region1: #{tpu_custom_call.1} parent=0
    #allocation4 [shape = 'u8[2048]{0}', space=vmem, size = 0x800, scoped, tag = 'output window, operand 2']
    #allocation5 [shape = 's32[2]{0}', space=sflag, size = 0x8, scoped, tag = 'scoped memory for tpu_custom_call.1']
    %12 = vsyncpa [#allocation5], 0
    %s13 = scalar_lea.sflag [#allocation5], 1
    %14 = vsyncpa %s13, 0
    loop: start=0, step=1, limit=4
    $region2: #{tpu_custom_call.1} parent=1 // loop_pre_header
      _
    $region3: #{tpu_custom_call.1} parent=1 // loop_header
      %s16 = sphi 0, %s20
      %p17 = scmp.ge.s32.totalorder %s16, 4
      %s26 = sphi 0, %s28
      %s29 = sphi 0, %s26
      %s30 = sphi 0, %s29
      %s46 = sphi 0, %s30
      %s50 = sphi 0, %s50
      %s52 = sphi 0, %s50
      %s53 = sphi 0, %s52
      %s67 = sphi 0, %s53
      %s71 = sphi 0, %s71
      %s73 = sphi 0, %s71
      %s74 = sphi 0, %s73
      %s88 = sphi 0, %s74
      %s92 = sphi 0, %s92
      %s94 = sphi 0, %s92
      %s95 = sphi 0, %s94
      %s109 = sphi 0, %s95
      %s115 = sphi 0, %s117
      %s118 = sphi 0, %s115
      %s119 = sphi 0, %s118
      %s135 = sphi 0, %s119
      %s141 = sphi 0, %s143
      %s144 = sphi 0, %s141
      %s145 = sphi 0, %s144
      %s161 = sphi 0, %s145
      %s167 = sphi 0, %s169
      %s170 = sphi 0, %s167
      %s171 = sphi 0, %s170
      %s187 = sphi 0, %s171
    $region4: #{tpu_custom_call.1} parent=1 // loop_header_branch
      %19 = sbr.rel (%p17) target = $region8
    $region5: #{tpu_custom_call.1} parent=1 // loop_body
      %s21 = ssub.s32 %s16, 1
      %s22 = ssub.s32 %s16, 2
      %s23 = sadd.s32 %s16, 1
      %s24 = ssub.s32 %s16, %s23
      %p25 = scmp.eq.s32.totalorder %s24, 0
      %s27 = sadd.s32 %s26, 1
      %s28 = scalar_select %p25, %s26, %s27
      %p31 = pneg %p25
      %p32 = scmp.eq.s32.totalorder %s16, 1
      %p33 = por %p31, %p32
      %p34 = scmp.ne.s32.totalorder %s26, %s29
      %p35 = scmp.eq.s32.totalorder %s16, 0
      %p36 = por %p34, %p35
      %p37 = scmp.ne.s32.totalorder %s26, %s29
      %p38 = scmp.eq.s32.totalorder %s21, 1
      %p39 = por %p37, %p38
      %p40 = scmp.ne.s32.totalorder %s29, %s30
      %p41 = scmp.eq.s32.totalorder %s21, 0
      %p42 = por %p40, %p41
      %p43 = scmp.ne.s32.totalorder %s29, %s30
      %p44 = scmp.eq.s32.totalorder %s22, 1
      %p45 = por %p43, %p44
      %p47 = scmp.ne.s32.totalorder %s30, %s46
      %p48 = scmp.eq.s32.totalorder %s22, 0
      %p49 = por %p47, %p48
      %s51 = sadd.s32 %s50, 1
      %p54 = scmp.eq.s32.totalorder %s16, 1
      %p55 = scmp.ne.s32.totalorder %s50, %s52
      %p56 = scmp.eq.s32.totalorder %s16, 0
      %p57 = por %p55, %p56
      %p58 = scmp.ne.s32.totalorder %s50, %s52
      %p59 = scmp.eq.s32.totalorder %s21, 1
      %p60 = por %p58, %p59
      %p61 = scmp.ne.s32.totalorder %s52, %s53
      %p62 = scmp.eq.s32.totalorder %s21, 0
      %p63 = por %p61, %p62
      %p64 = scmp.ne.s32.totalorder %s52, %s53
      %p65 = scmp.eq.s32.totalorder %s22, 1
      %p66 = por %p64, %p65
      %p68 = scmp.ne.s32.totalorder %s53, %s67
      %p69 = scmp.eq.s32.totalorder %s22, 0
      %p70 = por %p68, %p69
      %s72 = sadd.s32 %s71, 1
      %p75 = scmp.eq.s32.totalorder %s16, 1
      %p76 = scmp.ne.s32.totalorder %s71, %s73
      %p77 = scmp.eq.s32.totalorder %s16, 0
      %p78 = por %p76, %p77
      %p79 = scmp.ne.s32.totalorder %s71, %s73
      %p80 = scmp.eq.s32.totalorder %s21, 1
      %p81 = por %p79, %p80
      %p82 = scmp.ne.s32.totalorder %s73, %s74
      %p83 = scmp.eq.s32.totalorder %s21, 0
      %p84 = por %p82, %p83
      %p85 = scmp.ne.s32.totalorder %s73, %s74
      %p86 = scmp.eq.s32.totalorder %s22, 1
      %p87 = por %p85, %p86
      %p89 = scmp.ne.s32.totalorder %s74, %s88
      %p90 = scmp.eq.s32.totalorder %s22, 0
      %p91 = por %p89, %p90
      %s93 = sadd.s32 %s92, 1
      %p96 = scmp.eq.s32.totalorder %s16, 1
      %p97 = scmp.ne.s32.totalorder %s92, %s94
      %p98 = scmp.eq.s32.totalorder %s16, 0
      %p99 = por %p97, %p98
      %p100 = scmp.ne.s32.totalorder %s92, %s94
      %p101 = scmp.eq.s32.totalorder %s21, 1
      %p102 = por %p100, %p101
      %p103 = scmp.ne.s32.totalorder %s94, %s95
      %p104 = scmp.eq.s32.totalorder %s21, 0
      %p105 = por %p103, %p104
      %p106 = scmp.ne.s32.totalorder %s94, %s95
      %p107 = scmp.eq.s32.totalorder %s22, 1
      %p108 = por %p106, %p107
      %p110 = scmp.ne.s32.totalorder %s95, %s109
      %p111 = scmp.eq.s32.totalorder %s22, 0
      %p112 = por %p110, %p111
      %s113 = ssub.s32 %s16, %s23
      %p114 = scmp.eq.s32.totalorder %s113, 0
      %s116 = sadd.s32 %s115, 1
      %s117 = scalar_select %p114, %s115, %s116
      %p120 = pneg %p114
      %p121 = scmp.eq.s32.totalorder %s16, 1
      %p122 = por %p120, %p121
      %p123 = scmp.ne.s32.totalorder %s115, %s118
      %p124 = scmp.eq.s32.totalorder %s16, 0
      %p125 = por %p123, %p124
      %p126 = scmp.ne.s32.totalorder %s115, %s118
      %p127 = scmp.eq.s32.totalorder %s21, 1
      %p128 = por %p126, %p127
      %p129 = scmp.ne.s32.totalorder %s118, %s119
      %p130 = scmp.eq.s32.totalorder %s21, 0
      %p131 = por %p129, %p130
      %p132 = scmp.ne.s32.totalorder %s118, %s119
      %p133 = scmp.eq.s32.totalorder %s22, 1
      %p134 = por %p132, %p133
      %p136 = scmp.ne.s32.totalorder %s119, %s135
      %p137 = scmp.eq.s32.totalorder %s22, 0
      %p138 = por %p136, %p137
      %s139 = ssub.s32 %s16, %s23
      %p140 = scmp.eq.s32.totalorder %s139, 0
      %s142 = sadd.s32 %s141, 1
      %s143 = scalar_select %p140, %s141, %s142
      %p146 = pneg %p140
      %p147 = scmp.eq.s32.totalorder %s16, 1
      %p148 = por %p146, %p147
      %p149 = scmp.ne.s32.totalorder %s141, %s144
      %p150 = scmp.eq.s32.totalorder %s16, 0
      %p151 = por %p149, %p150
      %p152 = scmp.ne.s32.totalorder %s141, %s144
      %p153 = scmp.eq.s32.totalorder %s21, 1
      %p154 = por %p152, %p153
      %p155 = scmp.ne.s32.totalorder %s144, %s145
      %p156 = scmp.eq.s32.totalorder %s21, 0
      %p157 = por %p155, %p156
      %p158 = scmp.ne.s32.totalorder %s144, %s145
      %p159 = scmp.eq.s32.totalorder %s22, 1
      %p160 = por %p158, %p159
      %p162 = scmp.ne.s32.totalorder %s145, %s161
      %p163 = scmp.eq.s32.totalorder %s22, 0
      %p164 = por %p162, %p163
      %s165 = ssub.s32 %s16, %s23
      %p166 = scmp.eq.s32.totalorder %s165, 0
      %s168 = sadd.s32 %s167, 1
      %s169 = scalar_select %p166, %s167, %s168
      %p172 = pneg %p166
      %p173 = scmp.eq.s32.totalorder %s16, 1
      %p174 = por %p172, %p173
      %p175 = scmp.ne.s32.totalorder %s167, %s170
      %p176 = scmp.eq.s32.totalorder %s16, 0
      %p177 = por %p175, %p176
      %p178 = scmp.ne.s32.totalorder %s167, %s170
      %p179 = scmp.eq.s32.totalorder %s21, 1
      %p180 = por %p178, %p179
      %p181 = scmp.ne.s32.totalorder %s170, %s171
      %p182 = scmp.eq.s32.totalorder %s21, 0
      %p183 = por %p181, %p182
      %p184 = scmp.ne.s32.totalorder %s170, %s171
      %p185 = scmp.eq.s32.totalorder %s22, 1
      %p186 = por %p184, %p185
      %p188 = scmp.ne.s32.totalorder %s171, %s187
      %p189 = scmp.eq.s32.totalorder %s22, 0
      %p190 = por %p188, %p189
      %p191 = scmp.le.s32.totalorder 1, %s16
      %p192 = scmp.lt.s32.totalorder %s16, 3
      %p193 = pnand %p191, %p192
      %p194 = pneg %p193
      // Predicated region
      $region9: #{tpu_custom_call.1} parent=5 // pred_check
        _
      $region10: #{tpu_custom_call.1} parent=5 // pred_check_branch
        %196 = sbr.rel (%p193) target = $region12
      $region11: #{tpu_custom_call.1} parent=5 // pred_region
        %s197 = ssub.s32 %s16, 1
        // Predicated region
        $region13: #{tpu_custom_call.1} parent=11 // pred_check
          %p198 = pneg %p63
        $region14: #{tpu_custom_call.1} parent=11 // pred_check_branch
          %200 = sbr.rel (%p198) target = $region16
        $region15: #{tpu_custom_call.1} parent=11 // pred_region
          _
        $region16: #{tpu_custom_call.1} parent=11 // pred_fallthru
          _
        // Predicated region
        $region17: #{tpu_custom_call.1} parent=11 // pred_check
          %p201 = pneg %p84
        $region18: #{tpu_custom_call.1} parent=11 // pred_check_branch
          %203 = sbr.rel (%p201) target = $region20
        $region19: #{tpu_custom_call.1} parent=11 // pred_region
          _
        $region20: #{tpu_custom_call.1} parent=11 // pred_fallthru
          _
        // Predicated region
        $region21: #{tpu_custom_call.1} parent=11 // pred_check
          %p204 = pneg %p105
        $region22: #{tpu_custom_call.1} parent=11 // pred_check_branch
          %206 = sbr.rel (%p204) target = $region24
        $region23: #{tpu_custom_call.1} parent=11 // pred_region
          _
        $region24: #{tpu_custom_call.1} parent=11 // pred_fallthru
          _
      $region12: #{tpu_custom_call.1} parent=5 // pred_fallthru
        _
      %p207 = scmp.lt.s32.totalorder %s16, 2
      // Predicated region
      $region25: #{tpu_custom_call.1} parent=5 // pred_check
        %p208 = pneg %p207
      $region26: #{tpu_custom_call.1} parent=5 // pred_check_branch
        %210 = sbr.rel (%p208) target = $region28
      $region27: #{tpu_custom_call.1} parent=5 // pred_region
        // Predicated region
        $region29: #{tpu_custom_call.1} parent=27 // pred_check
          %p211 = pneg %p36
        $region30: #{tpu_custom_call.1} parent=27 // pred_check_branch
          %213 = sbr.rel (%p211) target = $region32
        $region31: #{tpu_custom_call.1} parent=27 // pred_region
          %p214 = scmp.lt.s32.totalorder %s16, 1
          %s215 = scalar_select %p214, %s16, 1
          %s216 = smul.addr %s215, 32
          %s217 = smul.addr %s216, 8
          %s218 = scalar_lea.vmem %s0, %s217
        $region32: #{tpu_custom_call.1} parent=27 // pred_fallthru
          _
      $region28: #{tpu_custom_call.1} parent=5 // pred_fallthru
        _
      %p219 = scmp.le.s32.totalorder 1, %s16
      %p220 = scmp.lt.s32.totalorder %s16, 3
      %p221 = pnand %p219, %p220
      %p222 = pneg %p221
      // Predicated region
      $region33: #{tpu_custom_call.1} parent=5 // pred_check
        _
      $region34: #{tpu_custom_call.1} parent=5 // pred_check_branch
        %224 = sbr.rel (%p221) target = $region36
      $region35: #{tpu_custom_call.1} parent=5 // pred_region
        %s225 = ssub.s32 %s16, 1
        %p226 = scmp.lt.s32.totalorder %s21, 1
        %s227 = scalar_select %p226, %s21, 1
        %s228 = smul.addr %s227, 32
        %s229 = smul.addr %s228, 8
        %s230 = scalar_lea.vmem %s0, %s229
        %p231 = pneg %p42
        %p232 = pneg %p39
        %p233 = pneg %p63
        %p234 = pneg %p60
        %p235 = pneg %p84
        %p236 = pneg %p81
        %p237 = pneg %p105
        %p238 = pneg %p102
        %p239 = pneg %p131
        %p240 = pneg %p128
        %p241 = scmp.lt.s32.totalorder %s21, 1
        %s242 = scalar_select %p241, %s21, 1
        %s243 = smul.addr %s242, 32
        %s244 = smul.addr %s243, 4
        %s245 = scalar_lea.vmem %s4, %s244
        %p246 = pneg %p157
        %p247 = pneg %p154
        %p248 = scmp.lt.s32.totalorder %s21, 1
        %s249 = scalar_select %p248, %s21, 1
        %s250 = smul.addr %s249, 32
        %s251 = smul.addr %s250, 4
        %s252 = scalar_lea.vmem %s5, %s251
        %p253 = pneg %p183
        %p254 = pneg %p180
        %s255 = sand.u32 %s170, 1
        %s256 = scalar_lea.sflag [#allocation5], %s255
        %s257 = sand.u32 %s170, 1
        %s258 = smul.addr %s257, 2
        %s259 = scalar_lea.vmem [#allocation4], %s258
        %p260 = scmp.lt.s32.totalorder %s21, 1
        %s261 = scalar_select %p260, %s21, 1
        %s262 = smul.addr %s261, 32
        %s263 = smul.addr %s262, 8
        %s264 = scalar_lea.vmem %s0, %s263
        %p265 = scmp.lt.s32.totalorder %s21, 1
        %s266 = scalar_select %p265, %s21, 1
        %s267 = smul.addr %s266, 32
        %s268 = smul.addr %s267, 4
        %s269 = scalar_lea.vmem %s4, %s268
        %p270 = scmp.lt.s32.totalorder %s21, 1
        %s271 = scalar_select %p270, %s21, 1
        %s272 = smul.addr %s271, 32
        %s273 = smul.addr %s272, 4
        %s274 = scalar_lea.vmem %s5, %s273
        %vm276 = vcmask 31744
        %277 = vst.msk [vmem:[#allocation2] sm:$0xff] %vm276, 0.0
        %278 = vst.msk [vmem:[#allocation2 + $0x8] sm:$0xff] %vm276, 0.0
        %vm279 = vcmask 25600
        %280 = vst.msk [vmem:[#allocation2 + $0x10] sm:$0x3] %vm279, 0.0
        %s281 = scalar_lea.vmem [#allocation2], 408
        %282 = vst.msk [vmem:[%s281] sm:$0xff] %vm276, 0.0
        %283 = vst.msk [vmem:[%s281 + $0x8] sm:$0xff] %vm276, 0.0
        %284 = vst.msk [vmem:[%s281 + $0x10] sm:$0x3] %vm279, 0.0
        %s285 = scalar_lea.vmem [#allocation2], 24
        %vm286 = vcmask 24576
        %287 = vst.msk [vmem:[%s285] sm:$0x1] %vm286, 0.0
        %288 = vst.msk [vmem:[%s285 + $0x18] sm:$0x1] %vm286, 0.0
        %289 = vst.msk [vmem:[%s285 + $0x30] sm:$0x1] %vm286, 0.0
        %290 = vst.msk [vmem:[%s285 + $0x48] sm:$0x1] %vm286, 0.0
        %291 = vst.msk [vmem:[%s285 + $0x60] sm:$0x1] %vm286, 0.0
        %292 = vst.msk [vmem:[%s285 + $0x78] sm:$0x1] %vm286, 0.0
        %293 = vst.msk [vmem:[%s285 + $0x90] sm:$0x1] %vm286, 0.0
        %294 = vst.msk [vmem:[%s285 + $0xa8] sm:$0x1] %vm286, 0.0
        %295 = vst.msk [vmem:[%s285 + $0xc0] sm:$0x1] %vm286, 0.0
        %296 = vst.msk [vmem:[%s285 + $0xd8] sm:$0x1] %vm286, 0.0
        %297 = vst.msk [vmem:[%s285 + $0xf0] sm:$0x1] %vm286, 0.0
        %298 = vst.msk [vmem:[%s285 + $0x108] sm:$0x1] %vm286, 0.0
        %299 = vst.msk [vmem:[%s285 + $0x120] sm:$0x1] %vm286, 0.0
        %300 = vst.msk [vmem:[%s285 + $0x138] sm:$0x1] %vm286, 0.0
        %301 = vst.msk [vmem:[%s285 + $0x150] sm:$0x1] %vm286, 0.0
        %302 = vst.msk [vmem:[%s285 + $0x168] sm:$0x1] %vm286, 0.0
        %303 = vst.msk [vmem:[%s285 + $0x11] sm:$0x1] %vm286, 0.0
        %304 = vst.msk [vmem:[%s285 + $0x29] sm:$0x1] %vm286, 0.0
        %305 = vst.msk [vmem:[%s285 + $0x41] sm:$0x1] %vm286, 0.0
        %306 = vst.msk [vmem:[%s285 + $0x59] sm:$0x1] %vm286, 0.0
        %307 = vst.msk [vmem:[%s285 + $0x71] sm:$0x1] %vm286, 0.0
        %308 = vst.msk [vmem:[%s285 + $0x89] sm:$0x1] %vm286, 0.0
        %309 = vst.msk [vmem:[%s285 + $0xa1] sm:$0x1] %vm286, 0.0
        %310 = vst.msk [vmem:[%s285 + $0xb9] sm:$0x1] %vm286, 0.0
        %311 = vst.msk [vmem:[%s285 + $0xd1] sm:$0x1] %vm286, 0.0
        %312 = vst.msk [vmem:[%s285 + $0xe9] sm:$0x1] %vm286, 0.0
        %313 = vst.msk [vmem:[%s285 + $0x101] sm:$0x1] %vm286, 0.0
        %314 = vst.msk [vmem:[%s285 + $0x119] sm:$0x1] %vm286, 0.0
        %315 = vst.msk [vmem:[%s285 + $0x131] sm:$0x1] %vm286, 0.0
        %316 = vst.msk [vmem:[%s285 + $0x149] sm:$0x1] %vm286, 0.0
        %317 = vst.msk [vmem:[%s285 + $0x161] sm:$0x1] %vm286, 0.0
        %318 = vst.msk [vmem:[%s285 + $0x179] sm:$0x1] %vm286, 0.0
        %v319 = vld [vmem:[%s264] sm:$0xff]
        %v320 = vld [vmem:[%s264 + $0x8] sm:$0xff]
        %v321 = vld [vmem:[%s264 + $0x10] sm:$0xff]
        %v322 = vld [vmem:[%s264 + $0x18] sm:$0xff]
        %v323 = vld [vmem:[%s264 + $0x20] sm:$0xff]
        %v324 = vld [vmem:[%s264 + $0x28] sm:$0xff]
        %v325 = vld [vmem:[%s264 + $0x30] sm:$0xff]
        %v326 = vld [vmem:[%s264 + $0x38] sm:$0xff]
        %v327 = vld [vmem:[%s264 + $0x40] sm:$0xff]
        %v328 = vld [vmem:[%s264 + $0x48] sm:$0xff]
        %v329 = vld [vmem:[%s264 + $0x50] sm:$0xff]
        %v330 = vld [vmem:[%s264 + $0x58] sm:$0xff]
        %v331 = vld [vmem:[%s264 + $0x60] sm:$0xff]
        %v332 = vld [vmem:[%s264 + $0x68] sm:$0xff]
        %v333 = vld [vmem:[%s264 + $0x70] sm:$0xff]
        %v334 = vld [vmem:[%s264 + $0x78] sm:$0xff]
        %v335 = vld [vmem:[%s264 + $0x80] sm:$0xff]
        %v336 = vld [vmem:[%s264 + $0x88] sm:$0xff]
        %v337 = vld [vmem:[%s264 + $0x90] sm:$0xff]
        %v338 = vld [vmem:[%s264 + $0x98] sm:$0xff]
        %v339 = vld [vmem:[%s264 + $0xa0] sm:$0xff]
        %v340 = vld [vmem:[%s264 + $0xa8] sm:$0xff]
        %v341 = vld [vmem:[%s264 + $0xb0] sm:$0xff]
        %v342 = vld [vmem:[%s264 + $0xb8] sm:$0xff]
        %v343 = vld [vmem:[%s264 + $0xc0] sm:$0xff]
        %v344 = vld [vmem:[%s264 + $0xc8] sm:$0xff]
        %v345 = vld [vmem:[%s264 + $0xd0] sm:$0xff]
        %v346 = vld [vmem:[%s264 + $0xd8] sm:$0xff]
        %v347 = vld [vmem:[%s264 + $0xe0] sm:$0xff]
        %v348 = vld [vmem:[%s264 + $0xe8] sm:$0xff]
        %v349 = vld [vmem:[%s264 + $0xf0] sm:$0xff]
        %v350 = vld [vmem:[%s264 + $0xf8] sm:$0xff]
        %v351 = vld [vmem:[%s1] sm:$0x1]
        %v353 = vlaneseq
        %v354 = vshrl.u32 %v353, 7
        %v355 = vsub.s32 0, %v354
        %v356 = vrot.slane %v351, %v355
        %v358 = vmul.f32 %v319, %v356
        %v359 = vmul.f32 %v320, %v356
        %v360 = vmul.f32 %v321, %v356
        %v361 = vmul.f32 %v322, %v356
        %v362 = vmul.f32 %v323, %v356
        %v363 = vmul.f32 %v324, %v356
        %v364 = vmul.f32 %v325, %v356
        %v365 = vmul.f32 %v326, %v356
        %v366 = vmul.f32 %v327, %v356
        %v367 = vmul.f32 %v328, %v356
        %v368 = vmul.f32 %v329, %v356
        %v369 = vmul.f32 %v330, %v356
        %v370 = vmul.f32 %v331, %v356
        %v371 = vmul.f32 %v332, %v356
        %v372 = vmul.f32 %v333, %v356
        %v373 = vmul.f32 %v334, %v356
        %v374 = vmul.f32 %v335, %v356
        %v375 = vmul.f32 %v336, %v356
        %v376 = vmul.f32 %v337, %v356
        %v377 = vmul.f32 %v338, %v356
        %v378 = vmul.f32 %v339, %v356
        %v379 = vmul.f32 %v340, %v356
        %v380 = vmul.f32 %v341, %v356
        %v381 = vmul.f32 %v342, %v356
        %v382 = vmul.f32 %v343, %v356
        %v383 = vmul.f32 %v344, %v356
        %v384 = vmul.f32 %v345, %v356
        %v385 = vmul.f32 %v346, %v356
        %v386 = vmul.f32 %v347, %v356
        %v387 = vmul.f32 %v348, %v356
        %v388 = vmul.f32 %v349, %v356
        %v389 = vmul.f32 %v350, %v356
        %v390 = vld [vmem:[%s2] sm:$0x1]
        %v392 = vlaneseq
        %v393 = vshrl.u32 %v392, 7
        %v394 = vsub.s32 0, %v393
        %v395 = vrot.slane %v390, %v394
        %v397 = vadd.f32 %v358, %v395
        %v398 = vadd.f32 %v359, %v395
        %v399 = vadd.f32 %v360, %v395
        %v400 = vadd.f32 %v361, %v395
        %v401 = vadd.f32 %v362, %v395
        %v402 = vadd.f32 %v363, %v395
        %v403 = vadd.f32 %v364, %v395
        %v404 = vadd.f32 %v365, %v395
        %v405 = vadd.f32 %v366, %v395
        %v406 = vadd.f32 %v367, %v395
        %v407 = vadd.f32 %v368, %v395
        %v408 = vadd.f32 %v369, %v395
        %v409 = vadd.f32 %v370, %v395
        %v410 = vadd.f32 %v371, %v395
        %v411 = vadd.f32 %v372, %v395
        %v412 = vadd.f32 %v373, %v395
        %v413 = vadd.f32 %v374, %v395
        %v414 = vadd.f32 %v375, %v395
        %v415 = vadd.f32 %v376, %v395
        %v416 = vadd.f32 %v377, %v395
        %v417 = vadd.f32 %v378, %v395
        %v418 = vadd.f32 %v379, %v395
        %v419 = vadd.f32 %v380, %v395
        %v420 = vadd.f32 %v381, %v395
        %v421 = vadd.f32 %v382, %v395
        %v422 = vadd.f32 %v383, %v395
        %v423 = vadd.f32 %v384, %v395
        %v424 = vadd.f32 %v385, %v395
        %v425 = vadd.f32 %v386, %v395
        %v426 = vadd.f32 %v387, %v395
        %v427 = vadd.f32 %v388, %v395
        %v428 = vadd.f32 %v389, %v395
        %v429 = vmax.f32 %v397, 0.0
        %v430 = vmax.f32 %v398, 0.0
        %v431 = vmax.f32 %v399, 0.0
        %v432 = vmax.f32 %v400, 0.0
        %v433 = vmax.f32 %v401, 0.0
        %v434 = vmax.f32 %v402, 0.0
        %v435 = vmax.f32 %v403, 0.0
        %v436 = vmax.f32 %v404, 0.0
        %v437 = vmax.f32 %v405, 0.0
        %v438 = vmax.f32 %v406, 0.0
        %v439 = vmax.f32 %v407, 0.0
        %v440 = vmax.f32 %v408, 0.0
        %v441 = vmax.f32 %v409, 0.0
        %v442 = vmax.f32 %v410, 0.0
        %v443 = vmax.f32 %v411, 0.0
        %v444 = vmax.f32 %v412, 0.0
        %v445 = vmax.f32 %v413, 0.0
        %v446 = vmax.f32 %v414, 0.0
        %v447 = vmax.f32 %v415, 0.0
        %v448 = vmax.f32 %v416, 0.0
        %v449 = vmax.f32 %v417, 0.0
        %v450 = vmax.f32 %v418, 0.0
        %v451 = vmax.f32 %v419, 0.0
        %v452 = vmax.f32 %v420, 0.0
        %v453 = vmax.f32 %v421, 0.0
        %v454 = vmax.f32 %v422, 0.0
        %v455 = vmax.f32 %v423, 0.0
        %v456 = vmax.f32 %v424, 0.0
        %v457 = vmax.f32 %v425, 0.0
        %v458 = vmax.f32 %v426, 0.0
        %v459 = vmax.f32 %v427, 0.0
        %v460 = vmax.f32 %v428, 0.0
        %461 = vst.msk [vmem:[%s285 + $0x1] sm:$0xff] %vm276, %v429
        %462 = vst.msk [vmem:[%s285 + $0x9] sm:$0xff] %vm276, %v430
        %463 = vst.msk [vmem:[%s285 + $0x19] sm:$0xff] %vm276, %v431
        %464 = vst.msk [vmem:[%s285 + $0x21] sm:$0xff] %vm276, %v432
        %465 = vst.msk [vmem:[%s285 + $0x31] sm:$0xff] %vm276, %v433
        %466 = vst.msk [vmem:[%s285 + $0x39] sm:$0xff] %vm276, %v434
        %467 = vst.msk [vmem:[%s285 + $0x49] sm:$0xff] %vm276, %v435
        %468 = vst.msk [vmem:[%s285 + $0x51] sm:$0xff] %vm276, %v436
        %469 = vst.msk [vmem:[%s285 + $0x61] sm:$0xff] %vm276, %v437
        %470 = vst.msk [vmem:[%s285 + $0x69] sm:$0xff] %vm276, %v438
        %471 = vst.msk [vmem:[%s285 + $0x79] sm:$0xff] %vm276, %v439
        %472 = vst.msk [vmem:[%s285 + $0x81] sm:$0xff] %vm276, %v440
        %473 = vst.msk [vmem:[%s285 + $0x91] sm:$0xff] %vm276, %v441
        %474 = vst.msk [vmem:[%s285 + $0x99] sm:$0xff] %vm276, %v442
        %475 = vst.msk [vmem:[%s285 + $0xa9] sm:$0xff] %vm276, %v443
        %476 = vst.msk [vmem:[%s285 + $0xb1] sm:$0xff] %vm276, %v444
        %477 = vst.msk [vmem:[%s285 + $0xc1] sm:$0xff] %vm276, %v445
        %478 = vst.msk [vmem:[%s285 + $0xc9] sm:$0xff] %vm276, %v446
        %479 = vst.msk [vmem:[%s285 + $0xd9] sm:$0xff] %vm276, %v447
        %480 = vst.msk [vmem:[%s285 + $0xe1] sm:$0xff] %vm276, %v448
        %481 = vst.msk [vmem:[%s285 + $0xf1] sm:$0xff] %vm276, %v449
        %482 = vst.msk [vmem:[%s285 + $0xf9] sm:$0xff] %vm276, %v450
        %483 = vst.msk [vmem:[%s285 + $0x109] sm:$0xff] %vm276, %v451
        %484 = vst.msk [vmem:[%s285 + $0x111] sm:$0xff] %vm276, %v452
        %485 = vst.msk [vmem:[%s285 + $0x121] sm:$0xff] %vm276, %v453
        %486 = vst.msk [vmem:[%s285 + $0x129] sm:$0xff] %vm276, %v454
        %487 = vst.msk [vmem:[%s285 + $0x139] sm:$0xff] %vm276, %v455
        %488 = vst.msk [vmem:[%s285 + $0x141] sm:$0xff] %vm276, %v456
        %489 = vst.msk [vmem:[%s285 + $0x151] sm:$0xff] %vm276, %v457
        %490 = vst.msk [vmem:[%s285 + $0x159] sm:$0xff] %vm276, %v458
        %491 = vst.msk [vmem:[%s285 + $0x169] sm:$0xff] %vm276, %v459
        %492 = vst.msk [vmem:[%s285 + $0x171] sm:$0xff] %vm276, %v460
        %v493 = vld [vmem:[#allocation2] sm:$0xff]
        %v494 = vld [vmem:[#allocation2 + $0x8] sm:$0xff]
        %v495 = vld [vmem:[#allocation2 + $0x18] sm:$0xff]
        %v496 = vld [vmem:[#allocation2 + $0x20] sm:$0xff]
        %v497 = vld [vmem:[#allocation2 + $0x30] sm:$0xff]
        %v498 = vld [vmem:[#allocation2 + $0x38] sm:$0xff]
        %v499 = vld [vmem:[#allocation2 + $0x48] sm:$0xff]
        %v500 = vld [vmem:[#allocation2 + $0x50] sm:$0xff]
        %v501 = vld [vmem:[#allocation2 + $0x60] sm:$0xff]
        %v502 = vld [vmem:[#allocation2 + $0x68] sm:$0xff]
        %v503 = vld [vmem:[#allocation2 + $0x78] sm:$0xff]
        %v504 = vld [vmem:[#allocation2 + $0x80] sm:$0xff]
        %v505 = vld [vmem:[#allocation2 + $0x90] sm:$0xff]
        %v506 = vld [vmem:[#allocation2 + $0x98] sm:$0xff]
        %v507 = vld [vmem:[#allocation2 + $0xa8] sm:$0xff]
        %v508 = vld [vmem:[#allocation2 + $0xb0] sm:$0xff]
        %v509 = vld [vmem:[#allocation2 + $0xc0] sm:$0xff]
        %v510 = vld [vmem:[#allocation2 + $0xc8] sm:$0xff]
        %v511 = vld [vmem:[#allocation2 + $0xd8] sm:$0xff]
        %v512 = vld [vmem:[#allocation2 + $0xe0] sm:$0xff]
        %v513 = vld [vmem:[#allocation2 + $0xf0] sm:$0xff]
        %v514 = vld [vmem:[#allocation2 + $0xf8] sm:$0xff]
        %v515 = vld [vmem:[#allocation2 + $0x108] sm:$0xff]
        %v516 = vld [vmem:[#allocation2 + $0x110] sm:$0xff]
        %v517 = vld [vmem:[#allocation2 + $0x120] sm:$0xff]
        %v518 = vld [vmem:[#allocation2 + $0x128] sm:$0xff]
        %v519 = vld [vmem:[#allocation2 + $0x138] sm:$0xff]
        %v520 = vld [vmem:[#allocation2 + $0x140] sm:$0xff]
        %v521 = vld [vmem:[#allocation2 + $0x150] sm:$0xff]
        %v522 = vld [vmem:[#allocation2 + $0x158] sm:$0xff]
        %v523 = vld [vmem:[#allocation2 + $0x168] sm:$0xff]
        %v524 = vld [vmem:[#allocation2 + $0x170] sm:$0xff]
        %v525 = vpack.c.bf16 %v494, %v493
        %v526 = vpack.c.bf16 %v496, %v495
        %v527 = vpack.c.bf16 %v498, %v497
        %v528 = vpack.c.bf16 %v500, %v499
        %v529 = vpack.c.bf16 %v502, %v501
        %v530 = vpack.c.bf16 %v504, %v503
        %v531 = vpack.c.bf16 %v506, %v505
        %v532 = vpack.c.bf16 %v508, %v507
        %v533 = vpack.c.bf16 %v510, %v509
        %v534 = vpack.c.bf16 %v512, %v511
        %v535 = vpack.c.bf16 %v514, %v513
        %v536 = vpack.c.bf16 %v516, %v515
        %v537 = vpack.c.bf16 %v518, %v517
        %v538 = vpack.c.bf16 %v520, %v519
        %v539 = vpack.c.bf16 %v522, %v521
        %v540 = vpack.c.bf16 %v524, %v523
        %541 = vst.msk [vmem:[#allocation3] sm:$0xff] %vm276, %v525
        %542 = vst.msk [vmem:[#allocation3 + $0x8] sm:$0xff] %vm276, %v526
        %543 = vst.msk [vmem:[#allocation3 + $0x10] sm:$0xff] %vm276, %v527
        %544 = vst.msk [vmem:[#allocation3 + $0x18] sm:$0xff] %vm276, %v528
        %545 = vst.msk [vmem:[#allocation3 + $0x20] sm:$0xff] %vm276, %v529
        %546 = vst.msk [vmem:[#allocation3 + $0x28] sm:$0xff] %vm276, %v530
        %547 = vst.msk [vmem:[#allocation3 + $0x30] sm:$0xff] %vm276, %v531
        %548 = vst.msk [vmem:[#allocation3 + $0x38] sm:$0xff] %vm276, %v532
        %549 = vst.msk [vmem:[#allocation3 + $0x40] sm:$0xff] %vm276, %v533
        %550 = vst.msk [vmem:[#allocation3 + $0x48] sm:$0xff] %vm276, %v534
        %551 = vst.msk [vmem:[#allocation3 + $0x50] sm:$0xff] %vm276, %v535
        %552 = vst.msk [vmem:[#allocation3 + $0x58] sm:$0xff] %vm276, %v536
        %553 = vst.msk [vmem:[#allocation3 + $0x60] sm:$0xff] %vm276, %v537
        %554 = vst.msk [vmem:[#allocation3 + $0x68] sm:$0xff] %vm276, %v538
        %555 = vst.msk [vmem:[#allocation3 + $0x70] sm:$0xff] %vm276, %v539
        %556 = vst.msk [vmem:[#allocation3 + $0x78] sm:$0xff] %vm276, %v540
        %v557 = vld [vmem:[#allocation2 + $0x1] sm:$0xff]
        %v558 = vld [vmem:[#allocation2 + $0x9] sm:$0xff]
        %v559 = vld [vmem:[#allocation2 + $0x19] sm:$0xff]
        %v560 = vld [vmem:[#allocation2 + $0x21] sm:$0xff]
        %v561 = vld [vmem:[#allocation2 + $0x31] sm:$0xff]
        %v562 = vld [vmem:[#allocation2 + $0x39] sm:$0xff]
        %v563 = vld [vmem:[#allocation2 + $0x49] sm:$0xff]
        %v564 = vld [vmem:[#allocation2 + $0x51] sm:$0xff]
        %v565 = vld [vmem:[#allocation2 + $0x61] sm:$0xff]
        %v566 = vld [vmem:[#allocation2 + $0x69] sm:$0xff]
        %v567 = vld [vmem:[#allocation2 + $0x79] sm:$0xff]
        %v568 = vld [vmem:[#allocation2 + $0x81] sm:$0xff]
        %v569 = vld [vmem:[#allocation2 + $0x91] sm:$0xff]
        %v570 = vld [vmem:[#allocation2 + $0x99] sm:$0xff]
        %v571 = vld [vmem:[#allocation2 + $0xa9] sm:$0xff]
        %v572 = vld [vmem:[#allocation2 + $0xb1] sm:$0xff]
        %v573 = vld [vmem:[#allocation2 + $0xc1] sm:$0xff]
        %v574 = vld [vmem:[#allocation2 + $0xc9] sm:$0xff]
        %v575 = vld [vmem:[#allocation2 + $0xd9] sm:$0xff]
        %v576 = vld [vmem:[#allocation2 + $0xe1] sm:$0xff]
        %v577 = vld [vmem:[#allocation2 + $0xf1] sm:$0xff]
        %v578 = vld [vmem:[#allocation2 + $0xf9] sm:$0xff]
        %v579 = vld [vmem:[#allocation2 + $0x109] sm:$0xff]
        %v580 = vld [vmem:[#allocation2 + $0x111] sm:$0xff]
        %v581 = vld [vmem:[#allocation2 + $0x121] sm:$0xff]
        %v582 = vld [vmem:[#allocation2 + $0x129] sm:$0xff]
        %v583 = vld [vmem:[#allocation2 + $0x139] sm:$0xff]
        %v584 = vld [vmem:[#allocation2 + $0x141] sm:$0xff]
        %v585 = vld [vmem:[#allocation2 + $0x151] sm:$0xff]
        %v586 = vld [vmem:[#allocation2 + $0x159] sm:$0xff]
        %v587 = vld [vmem:[#allocation2 + $0x169] sm:$0xff]
        %v588 = vld [vmem:[#allocation2 + $0x171] sm:$0xff]
        %v589 = vpack.c.bf16 %v558, %v557
        %v590 = vpack.c.bf16 %v560, %v559
        %v591 = vpack.c.bf16 %v562, %v561
        %v592 = vpack.c.bf16 %v564, %v563
        %v593 = vpack.c.bf16 %v566, %v565
        %v594 = vpack.c.bf16 %v568, %v567
        %v595 = vpack.c.bf16 %v570, %v569
        %v596 = vpack.c.bf16 %v572, %v571
        %v597 = vpack.c.bf16 %v574, %v573
        %v598 = vpack.c.bf16 %v576, %v575
        %v599 = vpack.c.bf16 %v578, %v577
        %v600 = vpack.c.bf16 %v580, %v579
        %v601 = vpack.c.bf16 %v582, %v581
        %v602 = vpack.c.bf16 %v584, %v583
        %v603 = vpack.c.bf16 %v586, %v585
        %v604 = vpack.c.bf16 %v588, %v587
        %621 = vrot.lane.b32.xlu0 %v589, 4
        %v622 = vpop.permute.xlu0 %621
        %623 = vrot.lane.b32.xlu0 %v590, 4
        %v624 = vpop.permute.xlu0 %623
        %625 = vrot.lane.b32.xlu0 %v591, 4
        %v626 = vpop.permute.xlu0 %625
        %627 = vrot.lane.b32.xlu0 %v592, 4
        %v628 = vpop.permute.xlu0 %627
        %629 = vrot.lane.b32.xlu0 %v593, 4
        %v630 = vpop.permute.xlu0 %629
        %631 = vrot.lane.b32.xlu0 %v594, 4
        %v632 = vpop.permute.xlu0 %631
        %633 = vrot.lane.b32.xlu0 %v595, 4
        %v634 = vpop.permute.xlu0 %633
        %635 = vrot.lane.b32.xlu0 %v596, 4
        %v636 = vpop.permute.xlu0 %635
        %637 = vrot.lane.b32.xlu0 %v597, 4
        %v638 = vpop.permute.xlu0 %637
        %639 = vrot.lane.b32.xlu0 %v598, 4
        %v640 = vpop.permute.xlu0 %639
        %641 = vrot.lane.b32.xlu0 %v599, 4
        %v642 = vpop.permute.xlu0 %641
        %643 = vrot.lane.b32.xlu0 %v600, 4
        %v644 = vpop.permute.xlu0 %643
        %645 = vrot.lane.b32.xlu0 %v601, 4
        %v646 = vpop.permute.xlu0 %645
        %647 = vrot.lane.b32.xlu0 %v602, 4
        %v648 = vpop.permute.xlu0 %647
        %649 = vrot.lane.b32.xlu0 %v603, 4
        %v650 = vpop.permute.xlu0 %649
        %651 = vrot.lane.b32.xlu0 %v604, 4
        %v652 = vpop.permute.xlu0 %651
        %vm669 = vcmask 64544
        %670 = vst.msk [vmem:[#allocation3] sm:$0xff] %vm669, %v622
        %671 = vst.msk [vmem:[#allocation3 + $0x8] sm:$0xff] %vm669, %v624
        %672 = vst.msk [vmem:[#allocation3 + $0x10] sm:$0xff] %vm669, %v626
        %673 = vst.msk [vmem:[#allocation3 + $0x18] sm:$0xff] %vm669, %v628
        %674 = vst.msk [vmem:[#allocation3 + $0x20] sm:$0xff] %vm669, %v630
        %675 = vst.msk [vmem:[#allocation3 + $0x28] sm:$0xff] %vm669, %v632
        %676 = vst.msk [vmem:[#allocation3 + $0x30] sm:$0xff] %vm669, %v634
        %677 = vst.msk [vmem:[#allocation3 + $0x38] sm:$0xff] %vm669, %v636
        %678 = vst.msk [vmem:[#allocation3 + $0x40] sm:$0xff] %vm669, %v638
        %679 = vst.msk [vmem:[#allocation3 + $0x48] sm:$0xff] %vm669, %v640
        %680 = vst.msk [vmem:[#allocation3 + $0x50] sm:$0xff] %vm669, %v642
        %681 = vst.msk [vmem:[#allocation3 + $0x58] sm:$0xff] %vm669, %v644
        %682 = vst.msk [vmem:[#allocation3 + $0x60] sm:$0xff] %vm669, %v646
        %683 = vst.msk [vmem:[#allocation3 + $0x68] sm:$0xff] %vm669, %v648
        %684 = vst.msk [vmem:[#allocation3 + $0x70] sm:$0xff] %vm669, %v650
        %685 = vst.msk [vmem:[#allocation3 + $0x78] sm:$0xff] %vm669, %v652
        %v686 = vld [vmem:[#allocation2 + $0x2] sm:$0xff]
        %v687 = vld [vmem:[#allocation2 + $0xa] sm:$0xff]
        %v688 = vld [vmem:[#allocation2 + $0x1a] sm:$0xff]
        %v689 = vld [vmem:[#allocation2 + $0x22] sm:$0xff]
        %v690 = vld [vmem:[#allocation2 + $0x32] sm:$0xff]
        %v691 = vld [vmem:[#allocation2 + $0x3a] sm:$0xff]
        %v692 = vld [vmem:[#allocation2 + $0x4a] sm:$0xff]
        %v693 = vld [vmem:[#allocation2 + $0x52] sm:$0xff]
        %v694 = vld [vmem:[#allocation2 + $0x62] sm:$0xff]
        %v695 = vld [vmem:[#allocation2 + $0x6a] sm:$0xff]
        %v696 = vld [vmem:[#allocation2 + $0x7a] sm:$0xff]
        %v697 = vld [vmem:[#allocation2 + $0x82] sm:$0xff]
        %v698 = vld [vmem:[#allocation2 + $0x92] sm:$0xff]
        %v699 = vld [vmem:[#allocation2 + $0x9a] sm:$0xff]
        %v700 = vld [vmem:[#allocation2 + $0xaa] sm:$0xff]
        %v701 = vld [vmem:[#allocation2 + $0xb2] sm:$0xff]
        %v702 = vld [vmem:[#allocation2 + $0xc2] sm:$0xff]
        %v703 = vld [vmem:[#allocation2 + $0xca] sm:$0xff]
        %v704 = vld [vmem:[#allocation2 + $0xda] sm:$0xff]
        %v705 = vld [vmem:[#allocation2 + $0xe2] sm:$0xff]
        %v706 = vld [vmem:[#allocation2 + $0xf2] sm:$0xff]
        %v707 = vld [vmem:[#allocation2 + $0xfa] sm:$0xff]
        %v708 = vld [vmem:[#allocation2 + $0x10a] sm:$0xff]
        %v709 = vld [vmem:[#allocation2 + $0x112] sm:$0xff]
        %v710 = vld [vmem:[#allocation2 + $0x122] sm:$0xff]
        %v711 = vld [vmem:[#allocation2 + $0x12a] sm:$0xff]
        %v712 = vld [vmem:[#allocation2 + $0x13a] sm:$0xff]
        %v713 = vld [vmem:[#allocation2 + $0x142] sm:$0xff]
        %v714 = vld [vmem:[#allocation2 + $0x152] sm:$0xff]
        %v715 = vld [vmem:[#allocation2 + $0x15a] sm:$0xff]
        %v716 = vld [vmem:[#allocation2 + $0x16a] sm:$0xff]
        %v717 = vld [vmem:[#allocation2 + $0x172] sm:$0xff]
        %v718 = vpack.c.bf16 %v687, %v686
        %v719 = vpack.c.bf16 %v689, %v688
        %v720 = vpack.c.bf16 %v691, %v690
        %v721 = vpack.c.bf16 %v693, %v692
        %v722 = vpack.c.bf16 %v695, %v694
        %v723 = vpack.c.bf16 %v697, %v696
        %v724 = vpack.c.bf16 %v699, %v698
        %v725 = vpack.c.bf16 %v701, %v700
        %v726 = vpack.c.bf16 %v703, %v702
        %v727 = vpack.c.bf16 %v705, %v704
        %v728 = vpack.c.bf16 %v707, %v706
        %v729 = vpack.c.bf16 %v709, %v708
        %v730 = vpack.c.bf16 %v711, %v710
        %v731 = vpack.c.bf16 %v713, %v712
        %v732 = vpack.c.bf16 %v715, %v714
        %v733 = vpack.c.bf16 %v717, %v716
        %750 = vrot.lane.b32.xlu0 %v718, 8
        %v751 = vpop.permute.xlu0 %750
        %752 = vrot.lane.b32.xlu0 %v719, 8
        %v753 = vpop.permute.xlu0 %752
        %754 = vrot.lane.b32.xlu0 %v720, 8
        %v755 = vpop.permute.xlu0 %754
        %756 = vrot.lane.b32.xlu0 %v721, 8
        %v757 = vpop.permute.xlu0 %756
        %758 = vrot.lane.b32.xlu0 %v722, 8
        %v759 = vpop.permute.xlu0 %758
        %760 = vrot.lane.b32.xlu0 %v723, 8
        %v761 = vpop.permute.xlu0 %760
        %762 = vrot.lane.b32.xlu0 %v724, 8
        %v763 = vpop.permute.xlu0 %762
        %764 = vrot.lane.b32.xlu0 %v725, 8
        %v765 = vpop.permute.xlu0 %764
        %766 = vrot.lane.b32.xlu0 %v726, 8
        %v767 = vpop.permute.xlu0 %766
        %768 = vrot.lane.b32.xlu0 %v727, 8
        %v769 = vpop.permute.xlu0 %768
        %770 = vrot.lane.b32.xlu0 %v728, 8
        %v771 = vpop.permute.xlu0 %770
        %772 = vrot.lane.b32.xlu0 %v729, 8
        %v773 = vpop.permute.xlu0 %772
        %774 = vrot.lane.b32.xlu0 %v730, 8
        %v775 = vpop.permute.xlu0 %774
        %776 = vrot.lane.b32.xlu0 %v731, 8
        %v777 = vpop.permute.xlu0 %776
        %778 = vrot.lane.b32.xlu0 %v732, 8
        %v779 = vpop.permute.xlu0 %778
        %780 = vrot.lane.b32.xlu0 %v733, 8
        %v781 = vpop.permute.xlu0 %780
        %vm798 = vcmask 97344
        %799 = vst.msk [vmem:[#allocation3] sm:$0xff] %vm798, %v751
        %800 = vst.msk [vmem:[#allocation3 + $0x8] sm:$0xff] %vm798, %v753
        %801 = vst.msk [vmem:[#allocation3 + $0x10] sm:$0xff] %vm798, %v755
        %802 = vst.msk [vmem:[#allocation3 + $0x18] sm:$0xff] %vm798, %v757
        %803 = vst.msk [vmem:[#allocation3 + $0x20] sm:$0xff] %vm798, %v759
        %804 = vst.msk [vmem:[#allocation3 + $0x28] sm:$0xff] %vm798, %v761
        %805 = vst.msk [vmem:[#allocation3 + $0x30] sm:$0xff] %vm798, %v763
        %806 = vst.msk [vmem:[#allocation3 + $0x38] sm:$0xff] %vm798, %v765
        %807 = vst.msk [vmem:[#allocation3 + $0x40] sm:$0xff] %vm798, %v767
        %808 = vst.msk [vmem:[#allocation3 + $0x48] sm:$0xff] %vm798, %v769
        %809 = vst.msk [vmem:[#allocation3 + $0x50] sm:$0xff] %vm798, %v771
        %810 = vst.msk [vmem:[#allocation3 + $0x58] sm:$0xff] %vm798, %v773
        %811 = vst.msk [vmem:[#allocation3 + $0x60] sm:$0xff] %vm798, %v775
        %812 = vst.msk [vmem:[#allocation3 + $0x68] sm:$0xff] %vm798, %v777
        %813 = vst.msk [vmem:[#allocation3 + $0x70] sm:$0xff] %vm798, %v779
        %814 = vst.msk [vmem:[#allocation3 + $0x78] sm:$0xff] %vm798, %v781
        %v815 = vld [vmem:[%s285] sm:$0xff]
        %v816 = vld [vmem:[%s285 + $0x8] sm:$0xff]
        %v817 = vld [vmem:[%s285 + $0x18] sm:$0xff]
        %v818 = vld [vmem:[%s285 + $0x20] sm:$0xff]
        %v819 = vld [vmem:[%s285 + $0x30] sm:$0xff]
        %v820 = vld [vmem:[%s285 + $0x38] sm:$0xff]
        %v821 = vld [vmem:[%s285 + $0x48] sm:$0xff]
        %v822 = vld [vmem:[%s285 + $0x50] sm:$0xff]
        %v823 = vld [vmem:[%s285 + $0x60] sm:$0xff]
        %v824 = vld [vmem:[%s285 + $0x68] sm:$0xff]
        %v825 = vld [vmem:[%s285 + $0x78] sm:$0xff]
        %v826 = vld [vmem:[%s285 + $0x80] sm:$0xff]
        %v827 = vld [vmem:[%s285 + $0x90] sm:$0xff]
        %v828 = vld [vmem:[%s285 + $0x98] sm:$0xff]
        %v829 = vld [vmem:[%s285 + $0xa8] sm:$0xff]
        %v830 = vld [vmem:[%s285 + $0xb0] sm:$0xff]
        %v831 = vld [vmem:[%s285 + $0xc0] sm:$0xff]
        %v832 = vld [vmem:[%s285 + $0xc8] sm:$0xff]
        %v833 = vld [vmem:[%s285 + $0xd8] sm:$0xff]
        %v834 = vld [vmem:[%s285 + $0xe0] sm:$0xff]
        %v835 = vld [vmem:[%s285 + $0xf0] sm:$0xff]
        %v836 = vld [vmem:[%s285 + $0xf8] sm:$0xff]
        %v837 = vld [vmem:[%s285 + $0x108] sm:$0xff]
        %v838 = vld [vmem:[%s285 + $0x110] sm:$0xff]
        %v839 = vld [vmem:[%s285 + $0x120] sm:$0xff]
        %v840 = vld [vmem:[%s285 + $0x128] sm:$0xff]
        %v841 = vld [vmem:[%s285 + $0x138] sm:$0xff]
        %v842 = vld [vmem:[%s285 + $0x140] sm:$0xff]
        %v843 = vld [vmem:[%s285 + $0x150] sm:$0xff]
        %v844 = vld [vmem:[%s285 + $0x158] sm:$0xff]
        %v845 = vld [vmem:[%s285 + $0x168] sm:$0xff]
        %v846 = vld [vmem:[%s285 + $0x170] sm:$0xff]
        %v847 = vpack.c.bf16 %v816, %v815
        %v848 = vpack.c.bf16 %v818, %v817
        %v849 = vpack.c.bf16 %v820, %v819
        %v850 = vpack.c.bf16 %v822, %v821
        %v851 = vpack.c.bf16 %v824, %v823
        %v852 = vpack.c.bf16 %v826, %v825
        %v853 = vpack.c.bf16 %v828, %v827
        %v854 = vpack.c.bf16 %v830, %v829
        %v855 = vpack.c.bf16 %v832, %v831
        %v856 = vpack.c.bf16 %v834, %v833
        %v857 = vpack.c.bf16 %v836, %v835
        %v858 = vpack.c.bf16 %v838, %v837
        %v859 = vpack.c.bf16 %v840, %v839
        %v860 = vpack.c.bf16 %v842, %v841
        %v861 = vpack.c.bf16 %v844, %v843
        %v862 = vpack.c.bf16 %v846, %v845
        %879 = vrot.lane.b32.xlu0 %v847, 12
        %v880 = vpop.permute.xlu0 %879
        %881 = vrot.lane.b32.xlu0 %v848, 12
        %v882 = vpop.permute.xlu0 %881
        %883 = vrot.lane.b32.xlu0 %v849, 12
        %v884 = vpop.permute.xlu0 %883
        %885 = vrot.lane.b32.xlu0 %v850, 12
        %v886 = vpop.permute.xlu0 %885
        %887 = vrot.lane.b32.xlu0 %v851, 12
        %v888 = vpop.permute.xlu0 %887
        %889 = vrot.lane.b32.xlu0 %v852, 12
        %v890 = vpop.permute.xlu0 %889
        %891 = vrot.lane.b32.xlu0 %v853, 12
        %v892 = vpop.permute.xlu0 %891
        %893 = vrot.lane.b32.xlu0 %v854, 12
        %v894 = vpop.permute.xlu0 %893
        %895 = vrot.lane.b32.xlu0 %v855, 12
        %v896 = vpop.permute.xlu0 %895
        %897 = vrot.lane.b32.xlu0 %v856, 12
        %v898 = vpop.permute.xlu0 %897
        %899 = vrot.lane.b32.xlu0 %v857, 12
        %v900 = vpop.permute.xlu0 %899
        %901 = vrot.lane.b32.xlu0 %v858, 12
        %v902 = vpop.permute.xlu0 %901
        %903 = vrot.lane.b32.xlu0 %v859, 12
        %v904 = vpop.permute.xlu0 %903
        %905 = vrot.lane.b32.xlu0 %v860, 12
        %v906 = vpop.permute.xlu0 %905
        %907 = vrot.lane.b32.xlu0 %v861, 12
        %v908 = vpop.permute.xlu0 %907
        %909 = vrot.lane.b32.xlu0 %v862, 12
        %v910 = vpop.permute.xlu0 %909
        %vm927 = vcmask 130144
        %928 = vst.msk [vmem:[#allocation3] sm:$0xff] %vm927, %v880
        %929 = vst.msk [vmem:[#allocation3 + $0x8] sm:$0xff] %vm927, %v882
        %930 = vst.msk [vmem:[#allocation3 + $0x10] sm:$0xff] %vm927, %v884
        %931 = vst.msk [vmem:[#allocation3 + $0x18] sm:$0xff] %vm927, %v886
        %932 = vst.msk [vmem:[#allocation3 + $0x20] sm:$0xff] %vm927, %v888
        %933 = vst.msk [vmem:[#allocation3 + $0x28] sm:$0xff] %vm927, %v890
        %934 = vst.msk [vmem:[#allocation3 + $0x30] sm:$0xff] %vm927, %v892
        %935 = vst.msk [vmem:[#allocation3 + $0x38] sm:$0xff] %vm927, %v894
        %936 = vst.msk [vmem:[#allocation3 + $0x40] sm:$0xff] %vm927, %v896
        %937 = vst.msk [vmem:[#allocation3 + $0x48] sm:$0xff] %vm927, %v898
        %938 = vst.msk [vmem:[#allocation3 + $0x50] sm:$0xff] %vm927, %v900
        %939 = vst.msk [vmem:[#allocation3 + $0x58] sm:$0xff] %vm927, %v902
        %940 = vst.msk [vmem:[#allocation3 + $0x60] sm:$0xff] %vm927, %v904
        %941 = vst.msk [vmem:[#allocation3 + $0x68] sm:$0xff] %vm927, %v906
        %942 = vst.msk [vmem:[#allocation3 + $0x70] sm:$0xff] %vm927, %v908
        %943 = vst.msk [vmem:[#allocation3 + $0x78] sm:$0xff] %vm927, %v910
        %v944 = vld [vmem:[%s285 + $0x1] sm:$0xff]
        %v945 = vld [vmem:[%s285 + $0x9] sm:$0xff]
        %v946 = vld [vmem:[%s285 + $0x19] sm:$0xff]
        %v947 = vld [vmem:[%s285 + $0x21] sm:$0xff]
        %v948 = vld [vmem:[%s285 + $0x31] sm:$0xff]
        %v949 = vld [vmem:[%s285 + $0x39] sm:$0xff]
        %v950 = vld [vmem:[%s285 + $0x49] sm:$0xff]
        %v951 = vld [vmem:[%s285 + $0x51] sm:$0xff]
        %v952 = vld [vmem:[%s285 + $0x61] sm:$0xff]
        %v953 = vld [vmem:[%s285 + $0x69] sm:$0xff]
        %v954 = vld [vmem:[%s285 + $0x79] sm:$0xff]
        %v955 = vld [vmem:[%s285 + $0x81] sm:$0xff]
        %v956 = vld [vmem:[%s285 + $0x91] sm:$0xff]
        %v957 = vld [vmem:[%s285 + $0x99] sm:$0xff]
        %v958 = vld [vmem:[%s285 + $0xa9] sm:$0xff]
        %v959 = vld [vmem:[%s285 + $0xb1] sm:$0xff]
        %v960 = vld [vmem:[%s285 + $0xc1] sm:$0xff]
        %v961 = vld [vmem:[%s285 + $0xc9] sm:$0xff]
        %v962 = vld [vmem:[%s285 + $0xd9] sm:$0xff]
        %v963 = vld [vmem:[%s285 + $0xe1] sm:$0xff]
        %v964 = vld [vmem:[%s285 + $0xf1] sm:$0xff]
        %v965 = vld [vmem:[%s285 + $0xf9] sm:$0xff]
        %v966 = vld [vmem:[%s285 + $0x109] sm:$0xff]
        %v967 = vld [vmem:[%s285 + $0x111] sm:$0xff]
        %v968 = vld [vmem:[%s285 + $0x121] sm:$0xff]
        %v969 = vld [vmem:[%s285 + $0x129] sm:$0xff]
        %v970 = vld [vmem:[%s285 + $0x139] sm:$0xff]
        %v971 = vld [vmem:[%s285 + $0x141] sm:$0xff]
        %v972 = vld [vmem:[%s285 + $0x151] sm:$0xff]
        %v973 = vld [vmem:[%s285 + $0x159] sm:$0xff]
        %v974 = vld [vmem:[%s285 + $0x169] sm:$0xff]
        %v975 = vld [vmem:[%s285 + $0x171] sm:$0xff]
        %v976 = vpack.c.bf16 %v945, %v944
        %v977 = vpack.c.bf16 %v947, %v946
        %v978 = vpack.c.bf16 %v949, %v948
        %v979 = vpack.c.bf16 %v951, %v950
        %v980 = vpack.c.bf16 %v953, %v952
        %v981 = vpack.c.bf16 %v955, %v954
        %v982 = vpack.c.bf16 %v957, %v956
        %v983 = vpack.c.bf16 %v959, %v958
        %v984 = vpack.c.bf16 %v961, %v960
        %v985 = vpack.c.bf16 %v963, %v962
        %v986 = vpack.c.bf16 %v965, %v964
        %v987 = vpack.c.bf16 %v967, %v966
        %v988 = vpack.c.bf16 %v969, %v968
        %v989 = vpack.c.bf16 %v971, %v970
        %v990 = vpack.c.bf16 %v973, %v972
        %v991 = vpack.c.bf16 %v975, %v974
        %1008 = vrot.lane.b32.xlu0 %v976, 16
        %v1009 = vpop.permute.xlu0 %1008
        %1010 = vrot.lane.b32.xlu0 %v977, 16
        %v1011 = vpop.permute.xlu0 %1010
        %1012 = vrot.lane.b32.xlu0 %v978, 16
        %v1013 = vpop.permute.xlu0 %1012
        %1014 = vrot.lane.b32.xlu0 %v979, 16
        %v1015 = vpop.permute.xlu0 %1014
        %1016 = vrot.lane.b32.xlu0 %v980, 16
        %v1017 = vpop.permute.xlu0 %1016
        %1018 = vrot.lane.b32.xlu0 %v981, 16
        %v1019 = vpop.permute.xlu0 %1018
        %1020 = vrot.lane.b32.xlu0 %v982, 16
        %v1021 = vpop.permute.xlu0 %1020
        %1022 = vrot.lane.b32.xlu0 %v983, 16
        %v1023 = vpop.permute.xlu0 %1022
        %1024 = vrot.lane.b32.xlu0 %v984, 16
        %v1025 = vpop.permute.xlu0 %1024
        %1026 = vrot.lane.b32.xlu0 %v985, 16
        %v1027 = vpop.permute.xlu0 %1026
        %1028 = vrot.lane.b32.xlu0 %v986, 16
        %v1029 = vpop.permute.xlu0 %1028
        %1030 = vrot.lane.b32.xlu0 %v987, 16
        %v1031 = vpop.permute.xlu0 %1030
        %1032 = vrot.lane.b32.xlu0 %v988, 16
        %v1033 = vpop.permute.xlu0 %1032
        %1034 = vrot.lane.b32.xlu0 %v989, 16
        %v1035 = vpop.permute.xlu0 %1034
        %1036 = vrot.lane.b32.xlu0 %v990, 16
        %v1037 = vpop.permute.xlu0 %1036
        %1038 = vrot.lane.b32.xlu0 %v991, 16
        %v1039 = vpop.permute.xlu0 %1038
        %vm1056 = vcmask 162944
        %1057 = vst.msk [vmem:[#allocation3] sm:$0xff] %vm1056, %v1009
        %1058 = vst.msk [vmem:[#allocation3 + $0x8] sm:$0xff] %vm1056, %v1011
        %1059 = vst.msk [vmem:[#allocation3 + $0x10] sm:$0xff] %vm1056, %v1013
        %1060 = vst.msk [vmem:[#allocation3 + $0x18] sm:$0xff] %vm1056, %v1015
        %1061 = vst.msk [vmem:[#allocation3 + $0x20] sm:$0xff] %vm1056, %v1017
        %1062 = vst.msk [vmem:[#allocation3 + $0x28] sm:$0xff] %vm1056, %v1019
        %1063 = vst.msk [vmem:[#allocation3 + $0x30] sm:$0xff] %vm1056, %v1021
        %1064 = vst.msk [vmem:[#allocation3 + $0x38] sm:$0xff] %vm1056, %v1023
        %1065 = vst.msk [vmem:[#allocation3 + $0x40] sm:$0xff] %vm1056, %v1025
        %1066 = vst.msk [vmem:[#allocation3 + $0x48] sm:$0xff] %vm1056, %v1027
        %1067 = vst.msk [vmem:[#allocation3 + $0x50] sm:$0xff] %vm1056, %v1029
        %1068 = vst.msk [vmem:[#allocation3 + $0x58] sm:$0xff] %vm1056, %v1031
        %1069 = vst.msk [vmem:[#allocation3 + $0x60] sm:$0xff] %vm1056, %v1033
        %1070 = vst.msk [vmem:[#allocation3 + $0x68] sm:$0xff] %vm1056, %v1035
        %1071 = vst.msk [vmem:[#allocation3 + $0x70] sm:$0xff] %vm1056, %v1037
        %1072 = vst.msk [vmem:[#allocation3 + $0x78] sm:$0xff] %vm1056, %v1039
        %v1073 = vld [vmem:[%s285 + $0x2] sm:$0xff]
        %v1074 = vld [vmem:[%s285 + $0xa] sm:$0xff]
        %v1075 = vld [vmem:[%s285 + $0x1a] sm:$0xff]
        %v1076 = vld [vmem:[%s285 + $0x22] sm:$0xff]
        %v1077 = vld [vmem:[%s285 + $0x32] sm:$0xff]
        %v1078 = vld [vmem:[%s285 + $0x3a] sm:$0xff]
        %v1079 = vld [vmem:[%s285 + $0x4a] sm:$0xff]
        %v1080 = vld [vmem:[%s285 + $0x52] sm:$0xff]
        %v1081 = vld [vmem:[%s285 + $0x62] sm:$0xff]
        %v1082 = vld [vmem:[%s285 + $0x6a] sm:$0xff]
        %v1083 = vld [vmem:[%s285 + $0x7a] sm:$0xff]
        %v1084 = vld [vmem:[%s285 + $0x82] sm:$0xff]
        %v1085 = vld [vmem:[%s285 + $0x92] sm:$0xff]
        %v1086 = vld [vmem:[%s285 + $0x9a] sm:$0xff]
        %v1087 = vld [vmem:[%s285 + $0xaa] sm:$0xff]
        %v1088 = vld [vmem:[%s285 + $0xb2] sm:$0xff]
        %v1089 = vld [vmem:[%s285 + $0xc2] sm:$0xff]
        %v1090 = vld [vmem:[%s285 + $0xca] sm:$0xff]
        %v1091 = vld [vmem:[%s285 + $0xda] sm:$0xff]
        %v1092 = vld [vmem:[%s285 + $0xe2] sm:$0xff]
        %v1093 = vld [vmem:[%s285 + $0xf2] sm:$0xff]
        %v1094 = vld [vmem:[%s285 + $0xfa] sm:$0xff]
        %v1095 = vld [vmem:[%s285 + $0x10a] sm:$0xff]
        %v1096 = vld [vmem:[%s285 + $0x112] sm:$0xff]
        %v1097 = vld [vmem:[%s285 + $0x122] sm:$0xff]
        %v1098 = vld [vmem:[%s285 + $0x12a] sm:$0xff]
        %v1099 = vld [vmem:[%s285 + $0x13a] sm:$0xff]
        %v1100 = vld [vmem:[%s285 + $0x142] sm:$0xff]
        %v1101 = vld [vmem:[%s285 + $0x152] sm:$0xff]
        %v1102 = vld [vmem:[%s285 + $0x15a] sm:$0xff]
        %v1103 = vld [vmem:[%s285 + $0x16a] sm:$0xff]
        %v1104 = vld [vmem:[%s285 + $0x172] sm:$0xff]
        %v1105 = vpack.c.bf16 %v1074, %v1073
        %v1106 = vpack.c.bf16 %v1076, %v1075
        %v1107 = vpack.c.bf16 %v1078, %v1077
        %v1108 = vpack.c.bf16 %v1080, %v1079
        %v1109 = vpack.c.bf16 %v1082, %v1081
        %v1110 = vpack.c.bf16 %v1084, %v1083
        %v1111 = vpack.c.bf16 %v1086, %v1085
        %v1112 = vpack.c.bf16 %v1088, %v1087
        %v1113 = vpack.c.bf16 %v1090, %v1089
        %v1114 = vpack.c.bf16 %v1092, %v1091
        %v1115 = vpack.c.bf16 %v1094, %v1093
        %v1116 = vpack.c.bf16 %v1096, %v1095
        %v1117 = vpack.c.bf16 %v1098, %v1097
        %v1118 = vpack.c.bf16 %v1100, %v1099
        %v1119 = vpack.c.bf16 %v1102, %v1101
        %v1120 = vpack.c.bf16 %v1104, %v1103
        %1137 = vrot.lane.b32.xlu0 %v1105, 20
        %v1138 = vpop.permute.xlu0 %1137
        %1139 = vrot.lane.b32.xlu0 %v1106, 20
        %v1140 = vpop.permute.xlu0 %1139
        %1141 = vrot.lane.b32.xlu0 %v1107, 20
        %v1142 = vpop.permute.xlu0 %1141
        %1143 = vrot.lane.b32.xlu0 %v1108, 20
        %v1144 = vpop.permute.xlu0 %1143
        %1145 = vrot.lane.b32.xlu0 %v1109, 20
        %v1146 = vpop.permute.xlu0 %1145
        %1147 = vrot.lane.b32.xlu0 %v1110, 20
        %v1148 = vpop.permute.xlu0 %1147
        %1149 = vrot.lane.b32.xlu0 %v1111, 20
        %v1150 = vpop.permute.xlu0 %1149
        %1151 = vrot.lane.b32.xlu0 %v1112, 20
        %v1152 = vpop.permute.xlu0 %1151
        %1153 = vrot.lane.b32.xlu0 %v1113, 20
        %v1154 = vpop.permute.xlu0 %1153
        %1155 = vrot.lane.b32.xlu0 %v1114, 20
        %v1156 = vpop.permute.xlu0 %1155
        %1157 = vrot.lane.b32.xlu0 %v1115, 20
        %v1158 = vpop.permute.xlu0 %1157
        %1159 = vrot.lane.b32.xlu0 %v1116, 20
        %v1160 = vpop.permute.xlu0 %1159
        %1161 = vrot.lane.b32.xlu0 %v1117, 20
        %v1162 = vpop.permute.xlu0 %1161
        %1163 = vrot.lane.b32.xlu0 %v1118, 20
        %v1164 = vpop.permute.xlu0 %1163
        %1165 = vrot.lane.b32.xlu0 %v1119, 20
        %v1166 = vpop.permute.xlu0 %1165
        %1167 = vrot.lane.b32.xlu0 %v1120, 20
        %v1168 = vpop.permute.xlu0 %1167
        %vm1185 = vcmask 195744
        %1186 = vst.msk [vmem:[#allocation3] sm:$0xff] %vm1185, %v1138
        %1187 = vst.msk [vmem:[#allocation3 + $0x8] sm:$0xff] %vm1185, %v1140
        %1188 = vst.msk [vmem:[#allocation3 + $0x10] sm:$0xff] %vm1185, %v1142
        %1189 = vst.msk [vmem:[#allocation3 + $0x18] sm:$0xff] %vm1185, %v1144
        %1190 = vst.msk [vmem:[#allocation3 + $0x20] sm:$0xff] %vm1185, %v1146
        %1191 = vst.msk [vmem:[#allocation3 + $0x28] sm:$0xff] %vm1185, %v1148
        %1192 = vst.msk [vmem:[#allocation3 + $0x30] sm:$0xff] %vm1185, %v1150
        %1193 = vst.msk [vmem:[#allocation3 + $0x38] sm:$0xff] %vm1185, %v1152
        %1194 = vst.msk [vmem:[#allocation3 + $0x40] sm:$0xff] %vm1185, %v1154
        %1195 = vst.msk [vmem:[#allocation3 + $0x48] sm:$0xff] %vm1185, %v1156
        %1196 = vst.msk [vmem:[#allocation3 + $0x50] sm:$0xff] %vm1185, %v1158
        %1197 = vst.msk [vmem:[#allocation3 + $0x58] sm:$0xff] %vm1185, %v1160
        %1198 = vst.msk [vmem:[#allocation3 + $0x60] sm:$0xff] %vm1185, %v1162
        %1199 = vst.msk [vmem:[#allocation3 + $0x68] sm:$0xff] %vm1185, %v1164
        %1200 = vst.msk [vmem:[#allocation3 + $0x70] sm:$0xff] %vm1185, %v1166
        %1201 = vst.msk [vmem:[#allocation3 + $0x78] sm:$0xff] %vm1185, %v1168
        %s1202 = scalar_lea.vmem [#allocation2], 48
        %v1203 = vld [vmem:[%s1202] sm:$0xff]
        %v1204 = vld [vmem:[%s1202 + $0x8] sm:$0xff]
        %v1205 = vld [vmem:[%s1202 + $0x18] sm:$0xff]
        %v1206 = vld [vmem:[%s1202 + $0x20] sm:$0xff]
        %v1207 = vld [vmem:[%s1202 + $0x30] sm:$0xff]
        %v1208 = vld [vmem:[%s1202 + $0x38] sm:$0xff]
        %v1209 = vld [vmem:[%s1202 + $0x48] sm:$0xff]
        %v1210 = vld [vmem:[%s1202 + $0x50] sm:$0xff]
        %v1211 = vld [vmem:[%s1202 + $0x60] sm:$0xff]
        %v1212 = vld [vmem:[%s1202 + $0x68] sm:$0xff]
        %v1213 = vld [vmem:[%s1202 + $0x78] sm:$0xff]
        %v1214 = vld [vmem:[%s1202 + $0x80] sm:$0xff]
        %v1215 = vld [vmem:[%s1202 + $0x90] sm:$0xff]
        %v1216 = vld [vmem:[%s1202 + $0x98] sm:$0xff]
        %v1217 = vld [vmem:[%s1202 + $0xa8] sm:$0xff]
        %v1218 = vld [vmem:[%s1202 + $0xb0] sm:$0xff]
        %v1219 = vld [vmem:[%s1202 + $0xc0] sm:$0xff]
        %v1220 = vld [vmem:[%s1202 + $0xc8] sm:$0xff]
        %v1221 = vld [vmem:[%s1202 + $0xd8] sm:$0xff]
        %v1222 = vld [vmem:[%s1202 + $0xe0] sm:$0xff]
        %v1223 = vld [vmem:[%s1202 + $0xf0] sm:$0xff]
        %v1224 = vld [vmem:[%s1202 + $0xf8] sm:$0xff]
        %v1225 = vld [vmem:[%s1202 + $0x108] sm:$0xff]
        %v1226 = vld [vmem:[%s1202 + $0x110] sm:$0xff]
        %v1227 = vld [vmem:[%s1202 + $0x120] sm:$0xff]
        %v1228 = vld [vmem:[%s1202 + $0x128] sm:$0xff]
        %v1229 = vld [vmem:[%s1202 + $0x138] sm:$0xff]
        %v1230 = vld [vmem:[%s1202 + $0x140] sm:$0xff]
        %v1231 = vld [vmem:[%s1202 + $0x150] sm:$0xff]
        %v1232 = vld [vmem:[%s1202 + $0x158] sm:$0xff]
        %v1233 = vld [vmem:[%s1202 + $0x168] sm:$0xff]
        %v1234 = vld [vmem:[%s1202 + $0x170] sm:$0xff]
        %v1235 = vpack.c.bf16 %v1204, %v1203
        %v1236 = vpack.c.bf16 %v1206, %v1205
        %v1237 = vpack.c.bf16 %v1208, %v1207
        %v1238 = vpack.c.bf16 %v1210, %v1209
        %v1239 = vpack.c.bf16 %v1212, %v1211
        %v1240 = vpack.c.bf16 %v1214, %v1213
        %v1241 = vpack.c.bf16 %v1216, %v1215
        %v1242 = vpack.c.bf16 %v1218, %v1217
        %v1243 = vpack.c.bf16 %v1220, %v1219
        %v1244 = vpack.c.bf16 %v1222, %v1221
        %v1245 = vpack.c.bf16 %v1224, %v1223
        %v1246 = vpack.c.bf16 %v1226, %v1225
        %v1247 = vpack.c.bf16 %v1228, %v1227
        %v1248 = vpack.c.bf16 %v1230, %v1229
        %v1249 = vpack.c.bf16 %v1232, %v1231
        %v1250 = vpack.c.bf16 %v1234, %v1233
        %1267 = vrot.lane.b32.xlu0 %v1235, 24
        %v1268 = vpop.permute.xlu0 %1267
        %1269 = vrot.lane.b32.xlu0 %v1236, 24
        %v1270 = vpop.permute.xlu0 %1269
        %1271 = vrot.lane.b32.xlu0 %v1237, 24
        %v1272 = vpop.permute.xlu0 %1271
        %1273 = vrot.lane.b32.xlu0 %v1238, 24
        %v1274 = vpop.permute.xlu0 %1273
        %1275 = vrot.lane.b32.xlu0 %v1239, 24
        %v1276 = vpop.permute.xlu0 %1275
        %1277 = vrot.lane.b32.xlu0 %v1240, 24
        %v1278 = vpop.permute.xlu0 %1277
        %1279 = vrot.lane.b32.xlu0 %v1241, 24
        %v1280 = vpop.permute.xlu0 %1279
        %1281 = vrot.lane.b32.xlu0 %v1242, 24
        %v1282 = vpop.permute.xlu0 %1281
        %1283 = vrot.lane.b32.xlu0 %v1243, 24
        %v1284 = vpop.permute.xlu0 %1283
        %1285 = vrot.lane.b32.xlu0 %v1244, 24
        %v1286 = vpop.permute.xlu0 %1285
        %1287 = vrot.lane.b32.xlu0 %v1245, 24
        %v1288 = vpop.permute.xlu0 %1287
        %1289 = vrot.lane.b32.xlu0 %v1246, 24
        %v1290 = vpop.permute.xlu0 %1289
        %1291 = vrot.lane.b32.xlu0 %v1247, 24
        %v1292 = vpop.permute.xlu0 %1291
        %1293 = vrot.lane.b32.xlu0 %v1248, 24
        %v1294 = vpop.permute.xlu0 %1293
        %1295 = vrot.lane.b32.xlu0 %v1249, 24
        %v1296 = vpop.permute.xlu0 %1295
        %1297 = vrot.lane.b32.xlu0 %v1250, 24
        %v1298 = vpop.permute.xlu0 %1297
        %vm1315 = vcmask 228544
        %1316 = vst.msk [vmem:[#allocation3] sm:$0xff] %vm1315, %v1268
        %1317 = vst.msk [vmem:[#allocation3 + $0x8] sm:$0xff] %vm1315, %v1270
        %1318 = vst.msk [vmem:[#allocation3 + $0x10] sm:$0xff] %vm1315, %v1272
        %1319 = vst.msk [vmem:[#allocation3 + $0x18] sm:$0xff] %vm1315, %v1274
        %1320 = vst.msk [vmem:[#allocation3 + $0x20] sm:$0xff] %vm1315, %v1276
        %1321 = vst.msk [vmem:[#allocation3 + $0x28] sm:$0xff] %vm1315, %v1278
        %1322 = vst.msk [vmem:[#allocation3 + $0x30] sm:$0xff] %vm1315, %v1280
        %1323 = vst.msk [vmem:[#allocation3 + $0x38] sm:$0xff] %vm1315, %v1282
        %1324 = vst.msk [vmem:[#allocation3 + $0x40] sm:$0xff] %vm1315, %v1284
        %1325 = vst.msk [vmem:[#allocation3 + $0x48] sm:$0xff] %vm1315, %v1286
        %1326 = vst.msk [vmem:[#allocation3 + $0x50] sm:$0xff] %vm1315, %v1288
        %1327 = vst.msk [vmem:[#allocation3 + $0x58] sm:$0xff] %vm1315, %v1290
        %1328 = vst.msk [vmem:[#allocation3 + $0x60] sm:$0xff] %vm1315, %v1292
        %1329 = vst.msk [vmem:[#allocation3 + $0x68] sm:$0xff] %vm1315, %v1294
        %1330 = vst.msk [vmem:[#allocation3 + $0x70] sm:$0xff] %vm1315, %v1296
        %1331 = vst.msk [vmem:[#allocation3 + $0x78] sm:$0xff] %vm1315, %v1298
        %v1332 = vld [vmem:[%s1202 + $0x1] sm:$0xff]
        %v1333 = vld [vmem:[%s1202 + $0x9] sm:$0xff]
        %v1334 = vld [vmem:[%s1202 + $0x19] sm:$0xff]
        %v1335 = vld [vmem:[%s1202 + $0x21] sm:$0xff]
        %v1336 = vld [vmem:[%s1202 + $0x31] sm:$0xff]
        %v1337 = vld [vmem:[%s1202 + $0x39] sm:$0xff]
        %v1338 = vld [vmem:[%s1202 + $0x49] sm:$0xff]
        %v1339 = vld [vmem:[%s1202 + $0x51] sm:$0xff]
        %v1340 = vld [vmem:[%s1202 + $0x61] sm:$0xff]
        %v1341 = vld [vmem:[%s1202 + $0x69] sm:$0xff]
        %v1342 = vld [vmem:[%s1202 + $0x79] sm:$0xff]
        %v1343 = vld [vmem:[%s1202 + $0x81] sm:$0xff]
        %v1344 = vld [vmem:[%s1202 + $0x91] sm:$0xff]
        %v1345 = vld [vmem:[%s1202 + $0x99] sm:$0xff]
        %v1346 = vld [vmem:[%s1202 + $0xa9] sm:$0xff]
        %v1347 = vld [vmem:[%s1202 + $0xb1] sm:$0xff]
        %v1348 = vld [vmem:[%s1202 + $0xc1] sm:$0xff]
        %v1349 = vld [vmem:[%s1202 + $0xc9] sm:$0xff]
        %v1350 = vld [vmem:[%s1202 + $0xd9] sm:$0xff]
        %v1351 = vld [vmem:[%s1202 + $0xe1] sm:$0xff]
        %v1352 = vld [vmem:[%s1202 + $0xf1] sm:$0xff]
        %v1353 = vld [vmem:[%s1202 + $0xf9] sm:$0xff]
        %v1354 = vld [vmem:[%s1202 + $0x109] sm:$0xff]
        %v1355 = vld [vmem:[%s1202 + $0x111] sm:$0xff]
        %v1356 = vld [vmem:[%s1202 + $0x121] sm:$0xff]
        %v1357 = vld [vmem:[%s1202 + $0x129] sm:$0xff]
        %v1358 = vld [vmem:[%s1202 + $0x139] sm:$0xff]
        %v1359 = vld [vmem:[%s1202 + $0x141] sm:$0xff]
        %v1360 = vld [vmem:[%s1202 + $0x151] sm:$0xff]
        %v1361 = vld [vmem:[%s1202 + $0x159] sm:$0xff]
        %v1362 = vld [vmem:[%s1202 + $0x169] sm:$0xff]
        %v1363 = vld [vmem:[%s1202 + $0x171] sm:$0xff]
        %v1364 = vpack.c.bf16 %v1333, %v1332
        %v1365 = vpack.c.bf16 %v1335, %v1334
        %v1366 = vpack.c.bf16 %v1337, %v1336
        %v1367 = vpack.c.bf16 %v1339, %v1338
        %v1368 = vpack.c.bf16 %v1341, %v1340
        %v1369 = vpack.c.bf16 %v1343, %v1342
        %v1370 = vpack.c.bf16 %v1345, %v1344
        %v1371 = vpack.c.bf16 %v1347, %v1346
        %v1372 = vpack.c.bf16 %v1349, %v1348
        %v1373 = vpack.c.bf16 %v1351, %v1350
        %v1374 = vpack.c.bf16 %v1353, %v1352
        %v1375 = vpack.c.bf16 %v1355, %v1354
        %v1376 = vpack.c.bf16 %v1357, %v1356
        %v1377 = vpack.c.bf16 %v1359, %v1358
        %v1378 = vpack.c.bf16 %v1361, %v1360
        %v1379 = vpack.c.bf16 %v1363, %v1362
        %1396 = vrot.lane.b32.xlu0 %v1364, 28
        %v1397 = vpop.permute.xlu0 %1396
        %1398 = vrot.lane.b32.xlu0 %v1365, 28
        %v1399 = vpop.permute.xlu0 %1398
        %1400 = vrot.lane.b32.xlu0 %v1366, 28
        %v1401 = vpop.permute.xlu0 %1400
        %1402 = vrot.lane.b32.xlu0 %v1367, 28
        %v1403 = vpop.permute.xlu0 %1402
        %1404 = vrot.lane.b32.xlu0 %v1368, 28
        %v1405 = vpop.permute.xlu0 %1404
        %1406 = vrot.lane.b32.xlu0 %v1369, 28
        %v1407 = vpop.permute.xlu0 %1406
        %1408 = vrot.lane.b32.xlu0 %v1370, 28
        %v1409 = vpop.permute.xlu0 %1408
        %1410 = vrot.lane.b32.xlu0 %v1371, 28
        %v1411 = vpop.permute.xlu0 %1410
        %1412 = vrot.lane.b32.xlu0 %v1372, 28
        %v1413 = vpop.permute.xlu0 %1412
        %1414 = vrot.lane.b32.xlu0 %v1373, 28
        %v1415 = vpop.permute.xlu0 %1414
        %1416 = vrot.lane.b32.xlu0 %v1374, 28
        %v1417 = vpop.permute.xlu0 %1416
        %1418 = vrot.lane.b32.xlu0 %v1375, 28
        %v1419 = vpop.permute.xlu0 %1418
        %1420 = vrot.lane.b32.xlu0 %v1376, 28
        %v1421 = vpop.permute.xlu0 %1420
        %1422 = vrot.lane.b32.xlu0 %v1377, 28
        %v1423 = vpop.permute.xlu0 %1422
        %1424 = vrot.lane.b32.xlu0 %v1378, 28
        %v1425 = vpop.permute.xlu0 %1424
        %1426 = vrot.lane.b32.xlu0 %v1379, 28
        %v1427 = vpop.permute.xlu0 %1426
        %vm1444 = vcmask 261344
        %1445 = vst.msk [vmem:[#allocation3] sm:$0xff] %vm1444, %v1397
        %1446 = vst.msk [vmem:[#allocation3 + $0x8] sm:$0xff] %vm1444, %v1399
        %1447 = vst.msk [vmem:[#allocation3 + $0x10] sm:$0xff] %vm1444, %v1401
        %1448 = vst.msk [vmem:[#allocation3 + $0x18] sm:$0xff] %vm1444, %v1403
        %1449 = vst.msk [vmem:[#allocation3 + $0x20] sm:$0xff] %vm1444, %v1405
        %1450 = vst.msk [vmem:[#allocation3 + $0x28] sm:$0xff] %vm1444, %v1407
        %1451 = vst.msk [vmem:[#allocation3 + $0x30] sm:$0xff] %vm1444, %v1409
        %1452 = vst.msk [vmem:[#allocation3 + $0x38] sm:$0xff] %vm1444, %v1411
        %1453 = vst.msk [vmem:[#allocation3 + $0x40] sm:$0xff] %vm1444, %v1413
        %1454 = vst.msk [vmem:[#allocation3 + $0x48] sm:$0xff] %vm1444, %v1415
        %1455 = vst.msk [vmem:[#allocation3 + $0x50] sm:$0xff] %vm1444, %v1417
        %1456 = vst.msk [vmem:[#allocation3 + $0x58] sm:$0xff] %vm1444, %v1419
        %1457 = vst.msk [vmem:[#allocation3 + $0x60] sm:$0xff] %vm1444, %v1421
        %1458 = vst.msk [vmem:[#allocation3 + $0x68] sm:$0xff] %vm1444, %v1423
        %1459 = vst.msk [vmem:[#allocation3 + $0x70] sm:$0xff] %vm1444, %v1425
        %1460 = vst.msk [vmem:[#allocation3 + $0x78] sm:$0xff] %vm1444, %v1427
        %v1461 = vld [vmem:[%s1202 + $0x2] sm:$0xff]
        %v1462 = vld [vmem:[%s1202 + $0xa] sm:$0xff]
        %v1463 = vld [vmem:[%s1202 + $0x1a] sm:$0xff]
        %v1464 = vld [vmem:[%s1202 + $0x22] sm:$0xff]
        %v1465 = vld [vmem:[%s1202 + $0x32] sm:$0xff]
        %v1466 = vld [vmem:[%s1202 + $0x3a] sm:$0xff]
        %v1467 = vld [vmem:[%s1202 + $0x4a] sm:$0xff]
        %v1468 = vld [vmem:[%s1202 + $0x52] sm:$0xff]
        %v1469 = vld [vmem:[%s1202 + $0x62] sm:$0xff]
        %v1470 = vld [vmem:[%s1202 + $0x6a] sm:$0xff]
        %v1471 = vld [vmem:[%s1202 + $0x7a] sm:$0xff]
        %v1472 = vld [vmem:[%s1202 + $0x82] sm:$0xff]
        %v1473 = vld [vmem:[%s1202 + $0x92] sm:$0xff]
        %v1474 = vld [vmem:[%s1202 + $0x9a] sm:$0xff]
        %v1475 = vld [vmem:[%s1202 + $0xaa] sm:$0xff]
        %v1476 = vld [vmem:[%s1202 + $0xb2] sm:$0xff]
        %v1477 = vld [vmem:[%s1202 + $0xc2] sm:$0xff]
        %v1478 = vld [vmem:[%s1202 + $0xca] sm:$0xff]
        %v1479 = vld [vmem:[%s1202 + $0xda] sm:$0xff]
        %v1480 = vld [vmem:[%s1202 + $0xe2] sm:$0xff]
        %v1481 = vld [vmem:[%s1202 + $0xf2] sm:$0xff]
        %v1482 = vld [vmem:[%s1202 + $0xfa] sm:$0xff]
        %v1483 = vld [vmem:[%s1202 + $0x10a] sm:$0xff]
        %v1484 = vld [vmem:[%s1202 + $0x112] sm:$0xff]
        %v1485 = vld [vmem:[%s1202 + $0x122] sm:$0xff]
        %v1486 = vld [vmem:[%s1202 + $0x12a] sm:$0xff]
        %v1487 = vld [vmem:[%s1202 + $0x13a] sm:$0xff]
        %v1488 = vld [vmem:[%s1202 + $0x142] sm:$0xff]
        %v1489 = vld [vmem:[%s1202 + $0x152] sm:$0xff]
        %v1490 = vld [vmem:[%s1202 + $0x15a] sm:$0xff]
        %v1491 = vld [vmem:[%s1202 + $0x16a] sm:$0xff]
        %v1492 = vld [vmem:[%s1202 + $0x172] sm:$0xff]
        %v1493 = vpack.c.bf16 %v1462, %v1461
        %v1494 = vpack.c.bf16 %v1464, %v1463
        %v1495 = vpack.c.bf16 %v1466, %v1465
        %v1496 = vpack.c.bf16 %v1468, %v1467
        %v1497 = vpack.c.bf16 %v1470, %v1469
        %v1498 = vpack.c.bf16 %v1472, %v1471
        %v1499 = vpack.c.bf16 %v1474, %v1473
        %v1500 = vpack.c.bf16 %v1476, %v1475
        %v1501 = vpack.c.bf16 %v1478, %v1477
        %v1502 = vpack.c.bf16 %v1480, %v1479
        %v1503 = vpack.c.bf16 %v1482, %v1481
        %v1504 = vpack.c.bf16 %v1484, %v1483
        %v1505 = vpack.c.bf16 %v1486, %v1485
        %v1506 = vpack.c.bf16 %v1488, %v1487
        %v1507 = vpack.c.bf16 %v1490, %v1489
        %v1508 = vpack.c.bf16 %v1492, %v1491
        %1525 = vrot.lane.b32.xlu0 %v1493, 32
        %v1526 = vpop.permute.xlu0 %1525
        %1527 = vrot.lane.b32.xlu0 %v1494, 32
        %v1528 = vpop.permute.xlu0 %1527
        %1529 = vrot.lane.b32.xlu0 %v1495, 32
        %v1530 = vpop.permute.xlu0 %1529
        %1531 = vrot.lane.b32.xlu0 %v1496, 32
        %v1532 = vpop.permute.xlu0 %1531
        %1533 = vrot.lane.b32.xlu0 %v1497, 32
        %v1534 = vpop.permute.xlu0 %1533
        %1535 = vrot.lane.b32.xlu0 %v1498, 32
        %v1536 = vpop.permute.xlu0 %1535
        %1537 = vrot.lane.b32.xlu0 %v1499, 32
        %v1538 = vpop.permute.xlu0 %1537
        %1539 = vrot.lane.b32.xlu0 %v1500, 32
        %v1540 = vpop.permute.xlu0 %1539
        %1541 = vrot.lane.b32.xlu0 %v1501, 32
        %v1542 = vpop.permute.xlu0 %1541
        %1543 = vrot.lane.b32.xlu0 %v1502, 32
        %v1544 = vpop.permute.xlu0 %1543
        %1545 = vrot.lane.b32.xlu0 %v1503, 32
        %v1546 = vpop.permute.xlu0 %1545
        %1547 = vrot.lane.b32.xlu0 %v1504, 32
        %v1548 = vpop.permute.xlu0 %1547
        %1549 = vrot.lane.b32.xlu0 %v1505, 32
        %v1550 = vpop.permute.xlu0 %1549
        %1551 = vrot.lane.b32.xlu0 %v1506, 32
        %v1552 = vpop.permute.xlu0 %1551
        %1553 = vrot.lane.b32.xlu0 %v1507, 32
        %v1554 = vpop.permute.xlu0 %1553
        %1555 = vrot.lane.b32.xlu0 %v1508, 32
        %v1556 = vpop.permute.xlu0 %1555
        %vm1573 = vcmask 294144
        %1574 = vst.msk [vmem:[#allocation3] sm:$0xff] %vm1573, %v1526
        %1575 = vst.msk [vmem:[#allocation3 + $0x8] sm:$0xff] %vm1573, %v1528
        %1576 = vst.msk [vmem:[#allocation3 + $0x10] sm:$0xff] %vm1573, %v1530
        %1577 = vst.msk [vmem:[#allocation3 + $0x18] sm:$0xff] %vm1573, %v1532
        %1578 = vst.msk [vmem:[#allocation3 + $0x20] sm:$0xff] %vm1573, %v1534
        %1579 = vst.msk [vmem:[#allocation3 + $0x28] sm:$0xff] %vm1573, %v1536
        %1580 = vst.msk [vmem:[#allocation3 + $0x30] sm:$0xff] %vm1573, %v1538
        %1581 = vst.msk [vmem:[#allocation3 + $0x38] sm:$0xff] %vm1573, %v1540
        %1582 = vst.msk [vmem:[#allocation3 + $0x40] sm:$0xff] %vm1573, %v1542
        %1583 = vst.msk [vmem:[#allocation3 + $0x48] sm:$0xff] %vm1573, %v1544
        %1584 = vst.msk [vmem:[#allocation3 + $0x50] sm:$0xff] %vm1573, %v1546
        %1585 = vst.msk [vmem:[#allocation3 + $0x58] sm:$0xff] %vm1573, %v1548
        %1586 = vst.msk [vmem:[#allocation3 + $0x60] sm:$0xff] %vm1573, %v1550
        %1587 = vst.msk [vmem:[#allocation3 + $0x68] sm:$0xff] %vm1573, %v1552
        %1588 = vst.msk [vmem:[#allocation3 + $0x70] sm:$0xff] %vm1573, %v1554
        %1589 = vst.msk [vmem:[#allocation3 + $0x78] sm:$0xff] %vm1573, %v1556
        %v1590 = vld [vmem:[#allocation3] sm:$0xff]
        %v1591 = vld [vmem:[#allocation3 + $0x8] sm:$0xff]
        %v1592 = vld [vmem:[#allocation3 + $0x10] sm:$0xff]
        %v1593 = vld [vmem:[#allocation3 + $0x18] sm:$0xff]
        %v1594 = vld [vmem:[#allocation3 + $0x20] sm:$0xff]
        %v1595 = vld [vmem:[#allocation3 + $0x28] sm:$0xff]
        %v1596 = vld [vmem:[#allocation3 + $0x30] sm:$0xff]
        %v1597 = vld [vmem:[#allocation3 + $0x38] sm:$0xff]
        %v1598 = vld [vmem:[#allocation3 + $0x40] sm:$0xff]
        %v1599 = vld [vmem:[#allocation3 + $0x48] sm:$0xff]
        %v1600 = vld [vmem:[#allocation3 + $0x50] sm:$0xff]
        %v1601 = vld [vmem:[#allocation3 + $0x58] sm:$0xff]
        %v1602 = vld [vmem:[#allocation3 + $0x60] sm:$0xff]
        %v1603 = vld [vmem:[#allocation3 + $0x68] sm:$0xff]
        %v1604 = vld [vmem:[#allocation3 + $0x70] sm:$0xff]
        %v1605 = vld [vmem:[#allocation3 + $0x78] sm:$0xff]
        %v1606 = vld [vmem:[%s3] sm:$0xf]
        %v1607 = vld [vmem:[%s3 + $0x4] sm:$0xf]
        %v1608 = vld [vmem:[%s3 + $0x8] sm:$0xf]
        %v1609 = vld [vmem:[%s3 + $0xc] sm:$0xf]
        %v1610 = vld [vmem:[%s3 + $0x10] sm:$0x3]
        %v1616 = vunpack.c.l.b16 %v1606
        %v1617 = vunpack.c.l.b16 %v1607
        %v1618 = vunpack.c.l.b16 %v1608
        %v1619 = vunpack.c.l.b16 %v1609
        %v1620 = vunpack.c.l.b16 %v1610
        %v1621 = vpack.c.b16 %v1617, %v1616
        %v1622 = vpack.c.b16 %v1619, %v1618
        %v1623 = vpack.c.b16 %v1620, %v1620
        %vm1626 = vcmask 293888
        %v1628 = vsel %vm1626, %v1590, 0
        %v1631 = vsel %vm1626, %v1591, 0
        %v1634 = vsel %vm1626, %v1592, 0
        %v1637 = vsel %vm1626, %v1593, 0
        %v1640 = vsel %vm1626, %v1594, 0
        %v1643 = vsel %vm1626, %v1595, 0
        %v1646 = vsel %vm1626, %v1596, 0
        %v1649 = vsel %vm1626, %v1597, 0
        %v1652 = vsel %vm1626, %v1598, 0
        %v1655 = vsel %vm1626, %v1599, 0
        %v1658 = vsel %vm1626, %v1600, 0
        %v1661 = vsel %vm1626, %v1601, 0
        %v1664 = vsel %vm1626, %v1602, 0
        %v1667 = vsel %vm1626, %v1603, 0
        %v1670 = vsel %vm1626, %v1604, 0
        %v1673 = vsel %vm1626, %v1605, 0
        %vm1675 = vcmask 1041408
        %v1677 = vsel %vm1675, %v1623, 0
        %1679 = vmatprep.subr.bf16.mxu0 0
        %1680 = vmatpush1.bf16.msra.mxu0 %v1621
        %1681 = vmatprep.subr.bf16.mxu0 0
        %1682 = vmatpush1.bf16.msra.mxu0 %v1622
        %1683 = vmatprep.subr.bf16.mxu0 0
        %1684 = vmatpush1.bf16.msra.mxu0 %v1677
        %1685 = vmatprep.subr.bf16.mxu0 0
        %1686 = vmatpush1.bf16.msra.mxu0 0
        %1687 = vmatprep.subr.bf16.mxu0 0
        %1688 = vmatpush1.bf16.msra.mxu0 0
        %1689 = vmatprep.subr.bf16.mxu0 0
        %1690 = vmatpush1.bf16.msra.mxu0 0
        %1691 = vmatprep.subr.bf16.mxu0 0
        %1692 = vmatpush1.bf16.msra.mxu0 0
        %1693 = vmatprep.subr.bf16.mxu0 0
        %1694 = vmatpush1.bf16.msra.mxu0 0
        %1695 = vmatprep.subr.bf16.mxu0 0
        %1696 = vmatpush1.bf16.msra.mxu0 0
        %1697 = vmatprep.subr.bf16.mxu0 0
        %1698 = vmatpush1.bf16.msra.mxu0 0
        %1699 = vmatprep.subr.bf16.mxu0 0
        %1700 = vmatpush1.bf16.msra.mxu0 0
        %1701 = vmatprep.subr.bf16.mxu0 0
        %1702 = vmatpush1.bf16.msra.mxu0 0
        %1703 = vmatprep.subr.bf16.mxu0 0
        %1704 = vmatpush1.bf16.msra.mxu0 0
        %1705 = vmatprep.subr.bf16.mxu0 0
        %1706 = vmatpush1.bf16.msra.mxu0 0
        %1707 = vmatprep.subr.bf16.mxu0 0
        %1708 = vmatpush1.bf16.msra.mxu0 0
        %1709 = vmatprep.subr.bf16.mxu0 0
        %1710 = vmatpush1.bf16.msra.mxu0 0
        %1711 = vmatprep.mubr.bf16.mxu0 0
        %1712 = vmatmul.mubr.bf16.gmra.mrb[0].mxu0 %v1628
        %v1713 = vpop.f32.mrb[0].mxu0
        %v1714 = vadd.f32 0.0, %v1713
        %v1715 = vpop.f32.mrb[0].mxu0
        %v1716 = vpop.f32.mrb[0].mxu0
        %v1717 = vadd.f32 0.0, %v1716
        %v1718 = vpop.f32.mrb[0].mxu0
        %1719 = vmatprep.mubr.bf16.mxu0 0
        %1720 = vmatmul.mubr.bf16.gmra.mrb[0].mxu0 %v1631
        %v1721 = vpop.f32.mrb[0].mxu0
        %v1722 = vadd.f32 0.0, %v1721
        %v1723 = vpop.f32.mrb[0].mxu0
        %v1724 = vpop.f32.mrb[0].mxu0
        %v1725 = vadd.f32 0.0, %v1724
        %v1726 = vpop.f32.mrb[0].mxu0
        %1727 = vmatprep.mubr.bf16.mxu0 0
        %1728 = vmatmul.mubr.bf16.gmra.mrb[0].mxu0 %v1634
        %v1729 = vpop.f32.mrb[0].mxu0
        %v1730 = vadd.f32 0.0, %v1729
        %v1731 = vpop.f32.mrb[0].mxu0
        %v1732 = vpop.f32.mrb[0].mxu0
        %v1733 = vadd.f32 0.0, %v1732
        %v1734 = vpop.f32.mrb[0].mxu0
        %1735 = vmatprep.mubr.bf16.mxu0 0
        %1736 = vmatmul.mubr.bf16.gmra.mrb[0].mxu0 %v1637
        %v1737 = vpop.f32.mrb[0].mxu0
        %v1738 = vadd.f32 0.0, %v1737
        %v1739 = vpop.f32.mrb[0].mxu0
        %v1740 = vpop.f32.mrb[0].mxu0
        %v1741 = vadd.f32 0.0, %v1740
        %v1742 = vpop.f32.mrb[0].mxu0
        %1743 = vmatprep.mubr.bf16.mxu0 0
        %1744 = vmatmul.mubr.bf16.gmra.mrb[0].mxu0 %v1640
        %v1745 = vpop.f32.mrb[0].mxu0
        %v1746 = vadd.f32 0.0, %v1745
        %v1747 = vpop.f32.mrb[0].mxu0
        %v1748 = vpop.f32.mrb[0].mxu0
        %v1749 = vadd.f32 0.0, %v1748
        %v1750 = vpop.f32.mrb[0].mxu0
        %1751 = vmatprep.mubr.bf16.mxu0 0
        %1752 = vmatmul.mubr.bf16.gmra.mrb[0].mxu0 %v1643
        %v1753 = vpop.f32.mrb[0].mxu0
        %v1754 = vadd.f32 0.0, %v1753
        %v1755 = vpop.f32.mrb[0].mxu0
        %v1756 = vpop.f32.mrb[0].mxu0
        %v1757 = vadd.f32 0.0, %v1756
        %v1758 = vpop.f32.mrb[0].mxu0
        %1759 = vmatprep.mubr.bf16.mxu0 0
        %1760 = vmatmul.mubr.bf16.gmra.mrb[0].mxu0 %v1646
        %v1761 = vpop.f32.mrb[0].mxu0
        %v1762 = vadd.f32 0.0, %v1761
        %v1763 = vpop.f32.mrb[0].mxu0
        %v1764 = vpop.f32.mrb[0].mxu0
        %v1765 = vadd.f32 0.0, %v1764
        %v1766 = vpop.f32.mrb[0].mxu0
        %1767 = vmatprep.mubr.bf16.mxu0 0
        %1768 = vmatmul.mubr.bf16.gmra.mrb[0].mxu0 %v1649
        %v1769 = vpop.f32.mrb[0].mxu0
        %v1770 = vadd.f32 0.0, %v1769
        %v1771 = vpop.f32.mrb[0].mxu0
        %v1772 = vpop.f32.mrb[0].mxu0
        %v1773 = vadd.f32 0.0, %v1772
        %v1774 = vpop.f32.mrb[0].mxu0
        %1775 = vmatprep.mubr.bf16.mxu0 0
        %1776 = vmatmul.mubr.bf16.gmra.mrb[0].mxu0 %v1652
        %v1777 = vpop.f32.mrb[0].mxu0
        %v1778 = vadd.f32 0.0, %v1777
        %v1779 = vpop.f32.mrb[0].mxu0
        %v1780 = vpop.f32.mrb[0].mxu0
        %v1781 = vadd.f32 0.0, %v1780
        %v1782 = vpop.f32.mrb[0].mxu0
        %1783 = vmatprep.mubr.bf16.mxu0 0
        %1784 = vmatmul.mubr.bf16.gmra.mrb[0].mxu0 %v1655
        %v1785 = vpop.f32.mrb[0].mxu0
        %v1786 = vadd.f32 0.0, %v1785
        %v1787 = vpop.f32.mrb[0].mxu0
        %v1788 = vpop.f32.mrb[0].mxu0
        %v1789 = vadd.f32 0.0, %v1788
        %v1790 = vpop.f32.mrb[0].mxu0
        %1791 = vmatprep.mubr.bf16.mxu0 0
        %1792 = vmatmul.mubr.bf16.gmra.mrb[0].mxu0 %v1658
        %v1793 = vpop.f32.mrb[0].mxu0
        %v1794 = vadd.f32 0.0, %v1793
        %v1795 = vpop.f32.mrb[0].mxu0
        %v1796 = vpop.f32.mrb[0].mxu0
        %v1797 = vadd.f32 0.0, %v1796
        %v1798 = vpop.f32.mrb[0].mxu0
        %1799 = vmatprep.mubr.bf16.mxu0 0
        %1800 = vmatmul.mubr.bf16.gmra.mrb[0].mxu0 %v1661
        %v1801 = vpop.f32.mrb[0].mxu0
        %v1802 = vadd.f32 0.0, %v1801
        %v1803 = vpop.f32.mrb[0].mxu0
        %v1804 = vpop.f32.mrb[0].mxu0
        %v1805 = vadd.f32 0.0, %v1804
        %v1806 = vpop.f32.mrb[0].mxu0
        %1807 = vmatprep.mubr.bf16.mxu0 0
        %1808 = vmatmul.mubr.bf16.gmra.mrb[0].mxu0 %v1664
        %v1809 = vpop.f32.mrb[0].mxu0
        %v1810 = vadd.f32 0.0, %v1809
        %v1811 = vpop.f32.mrb[0].mxu0
        %v1812 = vpop.f32.mrb[0].mxu0
        %v1813 = vadd.f32 0.0, %v1812
        %v1814 = vpop.f32.mrb[0].mxu0
        %1815 = vmatprep.mubr.bf16.mxu0 0
        %1816 = vmatmul.mubr.bf16.gmra.mrb[0].mxu0 %v1667
        %v1817 = vpop.f32.mrb[0].mxu0
        %v1818 = vadd.f32 0.0, %v1817
        %v1819 = vpop.f32.mrb[0].mxu0
        %v1820 = vpop.f32.mrb[0].mxu0
        %v1821 = vadd.f32 0.0, %v1820
        %v1822 = vpop.f32.mrb[0].mxu0
        %1823 = vmatprep.mubr.bf16.mxu0 0
        %1824 = vmatmul.mubr.bf16.gmra.mrb[0].mxu0 %v1670
        %v1825 = vpop.f32.mrb[0].mxu0
        %v1826 = vadd.f32 0.0, %v1825
        %v1827 = vpop.f32.mrb[0].mxu0
        %v1828 = vpop.f32.mrb[0].mxu0
        %v1829 = vadd.f32 0.0, %v1828
        %v1830 = vpop.f32.mrb[0].mxu0
        %1831 = vmatprep.mubr.bf16.mxu0 0
        %1832 = vmatmul.mubr.bf16.gmra.mrb[0].mxu0 %v1673
        %v1833 = vpop.f32.mrb[0].mxu0
        %v1834 = vadd.f32 0.0, %v1833
        %v1835 = vpop.f32.mrb[0].mxu0
        %v1836 = vpop.f32.mrb[0].mxu0
        %v1837 = vadd.f32 0.0, %v1836
        %v1838 = vpop.f32.mrb[0].mxu0
        %1839 = vdwg.mxu0
        %vm1840 = vcmask 64512
        %v1841 = vsel %vm1840, %v1714, 0.0
        %v1842 = vsel %vm1840, %v1717, 0.0
        %v1843 = vadd.f32 %v1841, %v1842
        %v1844 = vsel %vm1840, %v1722, 0.0
        %v1845 = vadd.f32 %v1843, %v1844
        %v1846 = vsel %vm1840, %v1725, 0.0
        %v1847 = vadd.f32 %v1845, %v1846
        %v1848 = vsel %vm1840, %v1730, 0.0
        %v1849 = vadd.f32 %v1847, %v1848
        %v1850 = vsel %vm1840, %v1733, 0.0
        %v1851 = vadd.f32 %v1849, %v1850
        %v1852 = vsel %vm1840, %v1738, 0.0
        %v1853 = vadd.f32 %v1851, %v1852
        %v1854 = vsel %vm1840, %v1741, 0.0
        %v1855 = vadd.f32 %v1853, %v1854
        %v1856 = vsel %vm1840, %v1746, 0.0
        %v1857 = vadd.f32 %v1855, %v1856
        %v1858 = vsel %vm1840, %v1749, 0.0
        %v1859 = vadd.f32 %v1857, %v1858
        %v1860 = vsel %vm1840, %v1754, 0.0
        %v1861 = vadd.f32 %v1859, %v1860
        %v1862 = vsel %vm1840, %v1757, 0.0
        %v1863 = vadd.f32 %v1861, %v1862
        %v1864 = vsel %vm1840, %v1762, 0.0
        %v1865 = vadd.f32 %v1863, %v1864
        %v1866 = vsel %vm1840, %v1765, 0.0
        %v1867 = vadd.f32 %v1865, %v1866
        %v1868 = vsel %vm1840, %v1770, 0.0
        %v1869 = vadd.f32 %v1867, %v1868
        %v1870 = vsel %vm1840, %v1773, 0.0
        %v1871 = vadd.f32 %v1869, %v1870
        %v1872 = vsel %vm1840, %v1778, 0.0
        %v1873 = vadd.f32 %v1871, %v1872
        %v1874 = vsel %vm1840, %v1781, 0.0
        %v1875 = vadd.f32 %v1873, %v1874
        %v1876 = vsel %vm1840, %v1786, 0.0
        %v1877 = vadd.f32 %v1875, %v1876
        %v1878 = vsel %vm1840, %v1789, 0.0
        %v1879 = vadd.f32 %v1877, %v1878
        %v1880 = vsel %vm1840, %v1794, 0.0
        %v1881 = vadd.f32 %v1879, %v1880
        %v1882 = vsel %vm1840, %v1797, 0.0
        %v1883 = vadd.f32 %v1881, %v1882
        %v1884 = vsel %vm1840, %v1802, 0.0
        %v1885 = vadd.f32 %v1883, %v1884
        %v1886 = vsel %vm1840, %v1805, 0.0
        %v1887 = vadd.f32 %v1885, %v1886
        %v1888 = vsel %vm1840, %v1810, 0.0
        %v1889 = vadd.f32 %v1887, %v1888
        %v1890 = vsel %vm1840, %v1813, 0.0
        %v1891 = vadd.f32 %v1889, %v1890
        %v1892 = vsel %vm1840, %v1818, 0.0
        %v1893 = vadd.f32 %v1891, %v1892
        %v1894 = vsel %vm1840, %v1821, 0.0
        %v1895 = vadd.f32 %v1893, %v1894
        %v1896 = vsel %vm1840, %v1826, 0.0
        %v1897 = vadd.f32 %v1895, %v1896
        %v1898 = vsel %vm1840, %v1829, 0.0
        %v1899 = vadd.f32 %v1897, %v1898
        %v1900 = vsel %vm1840, %v1834, 0.0
        %v1901 = vadd.f32 %v1899, %v1900
        %v1902 = vsel %vm1840, %v1837, 0.0
        %v1903 = vadd.f32 %v1901, %v1902
        %v1904 = vrot.slane %v1903, 4
        %v1905 = vadd.f32 %v1903, %v1904
        %v1906 = vrot.slane %v1905, 2
        %v1907 = vadd.f32 %v1905, %v1906
        %v1908 = vrot.slane %v1907, 1
        %v1909 = vadd.f32 %v1907, %v1908
        %v1910 = vmul.f32 %v1714, %v1714
        %v1911 = vmul.f32 %v1717, %v1717
        %v1912 = vmul.f32 %v1722, %v1722
        %v1913 = vmul.f32 %v1725, %v1725
        %v1914 = vmul.f32 %v1730, %v1730
        %v1915 = vmul.f32 %v1733, %v1733
        %v1916 = vmul.f32 %v1738, %v1738
        %v1917 = vmul.f32 %v1741, %v1741
        %v1918 = vmul.f32 %v1746, %v1746
        %v1919 = vmul.f32 %v1749, %v1749
        %v1920 = vmul.f32 %v1754, %v1754
        %v1921 = vmul.f32 %v1757, %v1757
        %v1922 = vmul.f32 %v1762, %v1762
        %v1923 = vmul.f32 %v1765, %v1765
        %v1924 = vmul.f32 %v1770, %v1770
        %v1925 = vmul.f32 %v1773, %v1773
        %v1926 = vmul.f32 %v1778, %v1778
        %v1927 = vmul.f32 %v1781, %v1781
        %v1928 = vmul.f32 %v1786, %v1786
        %v1929 = vmul.f32 %v1789, %v1789
        %v1930 = vmul.f32 %v1794, %v1794
        %v1931 = vmul.f32 %v1797, %v1797
        %v1932 = vmul.f32 %v1802, %v1802
        %v1933 = vmul.f32 %v1805, %v1805
        %v1934 = vmul.f32 %v1810, %v1810
        %v1935 = vmul.f32 %v1813, %v1813
        %v1936 = vmul.f32 %v1818, %v1818
        %v1937 = vmul.f32 %v1821, %v1821
        %v1938 = vmul.f32 %v1826, %v1826
        %v1939 = vmul.f32 %v1829, %v1829
        %v1940 = vmul.f32 %v1834, %v1834
        %v1941 = vmul.f32 %v1837, %v1837
        %v1942 = vsel %vm1840, %v1910, 0.0
        %v1943 = vsel %vm1840, %v1911, 0.0
        %v1944 = vadd.f32 %v1942, %v1943
        %v1945 = vsel %vm1840, %v1912, 0.0
        %v1946 = vadd.f32 %v1944, %v1945
        %v1947 = vsel %vm1840, %v1913, 0.0
        %v1948 = vadd.f32 %v1946, %v1947
        %v1949 = vsel %vm1840, %v1914, 0.0
        %v1950 = vadd.f32 %v1948, %v1949
        %v1951 = vsel %vm1840, %v1915, 0.0
        %v1952 = vadd.f32 %v1950, %v1951
        %v1953 = vsel %vm1840, %v1916, 0.0
        %v1954 = vadd.f32 %v1952, %v1953
        %v1955 = vsel %vm1840, %v1917, 0.0
        %v1956 = vadd.f32 %v1954, %v1955
        %v1957 = vsel %vm1840, %v1918, 0.0
        %v1958 = vadd.f32 %v1956, %v1957
        %v1959 = vsel %vm1840, %v1919, 0.0
        %v1960 = vadd.f32 %v1958, %v1959
        %v1961 = vsel %vm1840, %v1920, 0.0
        %v1962 = vadd.f32 %v1960, %v1961
        %v1963 = vsel %vm1840, %v1921, 0.0
        %v1964 = vadd.f32 %v1962, %v1963
        %v1965 = vsel %vm1840, %v1922, 0.0
        %v1966 = vadd.f32 %v1964, %v1965
        %v1967 = vsel %vm1840, %v1923, 0.0
        %v1968 = vadd.f32 %v1966, %v1967
        %v1969 = vsel %vm1840, %v1924, 0.0
        %v1970 = vadd.f32 %v1968, %v1969
        %v1971 = vsel %vm1840, %v1925, 0.0
        %v1972 = vadd.f32 %v1970, %v1971
        %v1973 = vsel %vm1840, %v1926, 0.0
        %v1974 = vadd.f32 %v1972, %v1973
        %v1975 = vsel %vm1840, %v1927, 0.0
        %v1976 = vadd.f32 %v1974, %v1975
        %v1977 = vsel %vm1840, %v1928, 0.0
        %v1978 = vadd.f32 %v1976, %v1977
        %v1979 = vsel %vm1840, %v1929, 0.0
        %v1980 = vadd.f32 %v1978, %v1979
        %v1981 = vsel %vm1840, %v1930, 0.0
        %v1982 = vadd.f32 %v1980, %v1981
        %v1983 = vsel %vm1840, %v1931, 0.0
        %v1984 = vadd.f32 %v1982, %v1983
        %v1985 = vsel %vm1840, %v1932, 0.0
        %v1986 = vadd.f32 %v1984, %v1985
        %v1987 = vsel %vm1840, %v1933, 0.0
        %v1988 = vadd.f32 %v1986, %v1987
        %v1989 = vsel %vm1840, %v1934, 0.0
        %v1990 = vadd.f32 %v1988, %v1989
        %v1991 = vsel %vm1840, %v1935, 0.0
        %v1992 = vadd.f32 %v1990, %v1991
        %v1993 = vsel %vm1840, %v1936, 0.0
        %v1994 = vadd.f32 %v1992, %v1993
        %v1995 = vsel %vm1840, %v1937, 0.0
        %v1996 = vadd.f32 %v1994, %v1995
        %v1997 = vsel %vm1840, %v1938, 0.0
        %v1998 = vadd.f32 %v1996, %v1997
        %v1999 = vsel %vm1840, %v1939, 0.0
        %v2000 = vadd.f32 %v1998, %v1999
        %v2001 = vsel %vm1840, %v1940, 0.0
        %v2002 = vadd.f32 %v2000, %v2001
        %v2003 = vsel %vm1840, %v1941, 0.0
        %v2004 = vadd.f32 %v2002, %v2003
        %v2005 = vrot.slane %v2004, 4
        %v2006 = vadd.f32 %v2004, %v2005
        %v2007 = vrot.slane %v2006, 2
        %v2008 = vadd.f32 %v2006, %v2007
        %v2009 = vrot.slane %v2008, 1
        %v2010 = vadd.f32 %v2008, %v2009
        %vm2011 = vcmask 1040384
        %v2012 = vsel %vm2011, %v1909, %v2010
        %vm2013 = vcmask 58368
        %2014 = vst.msk [vmem:[%s259] sm:$0x3] %vm2013, %v2012
        %v2015 = vpack.c.bf16 %v1717, %v1714
        %v2016 = vpack.c.bf16 %v1725, %v1722
        %v2017 = vpack.c.bf16 %v1733, %v1730
        %v2018 = vpack.c.bf16 %v1741, %v1738
        %v2019 = vpack.c.bf16 %v1749, %v1746
        %v2020 = vpack.c.bf16 %v1757, %v1754
        %v2021 = vpack.c.bf16 %v1765, %v1762
        %v2022 = vpack.c.bf16 %v1773, %v1770
        %v2023 = vpack.c.bf16 %v1781, %v1778
        %v2024 = vpack.c.bf16 %v1789, %v1786
        %v2025 = vpack.c.bf16 %v1797, %v1794
        %v2026 = vpack.c.bf16 %v1805, %v1802
        %v2027 = vpack.c.bf16 %v1813, %v1810
        %v2028 = vpack.c.bf16 %v1821, %v1818
        %v2029 = vpack.c.bf16 %v1829, %v1826
        %v2030 = vpack.c.bf16 %v1837, %v1834
        %v2047 = vunpack.c.l.b16 %v2015
        %v2048 = vunpack.c.h.b16 %v2015
        %v2049 = vunpack.c.l.b16 %v2016
        %v2050 = vunpack.c.h.b16 %v2016
        %v2051 = vunpack.c.l.b16 %v2017
        %v2052 = vunpack.c.h.b16 %v2017
        %v2053 = vunpack.c.l.b16 %v2018
        %v2054 = vunpack.c.h.b16 %v2018
        %v2055 = vunpack.c.l.b16 %v2019
        %v2056 = vunpack.c.h.b16 %v2019
        %v2057 = vunpack.c.l.b16 %v2020
        %v2058 = vunpack.c.h.b16 %v2020
        %v2059 = vunpack.c.l.b16 %v2021
        %v2060 = vunpack.c.h.b16 %v2021
        %v2061 = vunpack.c.l.b16 %v2022
        %v2062 = vunpack.c.h.b16 %v2022
        %v2063 = vunpack.c.l.b16 %v2023
        %v2064 = vunpack.c.h.b16 %v2023
        %v2065 = vunpack.c.l.b16 %v2024
        %v2066 = vunpack.c.h.b16 %v2024
        %v2067 = vunpack.c.l.b16 %v2025
        %v2068 = vunpack.c.h.b16 %v2025
        %v2069 = vunpack.c.l.b16 %v2026
        %v2070 = vunpack.c.h.b16 %v2026
        %v2071 = vunpack.c.l.b16 %v2027
        %v2072 = vunpack.c.h.b16 %v2027
        %v2073 = vunpack.c.l.b16 %v2028
        %v2074 = vunpack.c.h.b16 %v2028
        %v2075 = vunpack.c.l.b16 %v2029
        %v2076 = vunpack.c.h.b16 %v2029
        %v2077 = vunpack.c.l.b16 %v2030
        %v2078 = vunpack.c.h.b16 %v2030
        %v2079 = vpack.c.b16 %v2047, %v2047
        %v2080 = vpack.c.b16 %v2048, %v2048
        %v2081 = vpack.c.b16 %v2049, %v2049
        %v2082 = vpack.c.b16 %v2050, %v2050
        %v2083 = vpack.c.b16 %v2051, %v2051
        %v2084 = vpack.c.b16 %v2052, %v2052
        %v2085 = vpack.c.b16 %v2053, %v2053
        %v2086 = vpack.c.b16 %v2054, %v2054
        %v2087 = vpack.c.b16 %v2055, %v2055
        %v2088 = vpack.c.b16 %v2056, %v2056
        %v2089 = vpack.c.b16 %v2057, %v2057
        %v2090 = vpack.c.b16 %v2058, %v2058
        %v2091 = vpack.c.b16 %v2059, %v2059
        %v2092 = vpack.c.b16 %v2060, %v2060
        %v2093 = vpack.c.b16 %v2061, %v2061
        %v2094 = vpack.c.b16 %v2062, %v2062
        %v2095 = vpack.c.b16 %v2063, %v2063
        %v2096 = vpack.c.b16 %v2064, %v2064
        %v2097 = vpack.c.b16 %v2065, %v2065
        %v2098 = vpack.c.b16 %v2066, %v2066
        %v2099 = vpack.c.b16 %v2067, %v2067
        %v2100 = vpack.c.b16 %v2068, %v2068
        %v2101 = vpack.c.b16 %v2069, %v2069
        %v2102 = vpack.c.b16 %v2070, %v2070
        %v2103 = vpack.c.b16 %v2071, %v2071
        %v2104 = vpack.c.b16 %v2072, %v2072
        %v2105 = vpack.c.b16 %v2073, %v2073
        %v2106 = vpack.c.b16 %v2074, %v2074
        %v2107 = vpack.c.b16 %v2075, %v2075
        %v2108 = vpack.c.b16 %v2076, %v2076
        %v2109 = vpack.c.b16 %v2077, %v2077
        %v2110 = vpack.c.b16 %v2078, %v2078
        %vm2143 = vcmask 60416
        %2144 = vst.msk [vmem:[%s269] sm:$0xf] %vm2143, %v2079
        %2145 = vst.msk [vmem:[%s269 + $0x4] sm:$0xf] %vm2143, %v2080
        %2146 = vst.msk [vmem:[%s269 + $0x8] sm:$0xf] %vm2143, %v2081
        %2147 = vst.msk [vmem:[%s269 + $0xc] sm:$0xf] %vm2143, %v2082
        %2148 = vst.msk [vmem:[%s269 + $0x10] sm:$0xf] %vm2143, %v2083
        %2149 = vst.msk [vmem:[%s269 + $0x14] sm:$0xf] %vm2143, %v2084
        %2150 = vst.msk [vmem:[%s269 + $0x18] sm:$0xf] %vm2143, %v2085
        %2151 = vst.msk [vmem:[%s269 + $0x1c] sm:$0xf] %vm2143, %v2086
        %2152 = vst.msk [vmem:[%s269 + $0x20] sm:$0xf] %vm2143, %v2087
        %2153 = vst.msk [vmem:[%s269 + $0x24] sm:$0xf] %vm2143, %v2088
        %2154 = vst.msk [vmem:[%s269 + $0x28] sm:$0xf] %vm2143, %v2089
        %2155 = vst.msk [vmem:[%s269 + $0x2c] sm:$0xf] %vm2143, %v2090
        %2156 = vst.msk [vmem:[%s269 + $0x30] sm:$0xf] %vm2143, %v2091
        %2157 = vst.msk [vmem:[%s269 + $0x34] sm:$0xf] %vm2143, %v2092
        %2158 = vst.msk [vmem:[%s269 + $0x38] sm:$0xf] %vm2143, %v2093
        %2159 = vst.msk [vmem:[%s269 + $0x3c] sm:$0xf] %vm2143, %v2094
        %2160 = vst.msk [vmem:[%s269 + $0x40] sm:$0xf] %vm2143, %v2095
        %2161 = vst.msk [vmem:[%s269 + $0x44] sm:$0xf] %vm2143, %v2096
        %2162 = vst.msk [vmem:[%s269 + $0x48] sm:$0xf] %vm2143, %v2097
        %2163 = vst.msk [vmem:[%s269 + $0x4c] sm:$0xf] %vm2143, %v2098
        %2164 = vst.msk [vmem:[%s269 + $0x50] sm:$0xf] %vm2143, %v2099
        %2165 = vst.msk [vmem:[%s269 + $0x54] sm:$0xf] %vm2143, %v2100
        %2166 = vst.msk [vmem:[%s269 + $0x58] sm:$0xf] %vm2143, %v2101
        %2167 = vst.msk [vmem:[%s269 + $0x5c] sm:$0xf] %vm2143, %v2102
        %2168 = vst.msk [vmem:[%s269 + $0x60] sm:$0xf] %vm2143, %v2103
        %2169 = vst.msk [vmem:[%s269 + $0x64] sm:$0xf] %vm2143, %v2104
        %2170 = vst.msk [vmem:[%s269 + $0x68] sm:$0xf] %vm2143, %v2105
        %2171 = vst.msk [vmem:[%s269 + $0x6c] sm:$0xf] %vm2143, %v2106
        %2172 = vst.msk [vmem:[%s269 + $0x70] sm:$0xf] %vm2143, %v2107
        %2173 = vst.msk [vmem:[%s269 + $0x74] sm:$0xf] %vm2143, %v2108
        %2174 = vst.msk [vmem:[%s269 + $0x78] sm:$0xf] %vm2143, %v2109
        %2175 = vst.msk [vmem:[%s269 + $0x7c] sm:$0xf] %vm2143, %v2110
        %2176 = vrot.lane.b32.xlu0 %v2079, 120
        %v2177 = vpop.permute.xlu0 %2176
        %2178 = vrot.lane.b32.xlu0 %v2080, 120
        %v2179 = vpop.permute.xlu0 %2178
        %2180 = vrot.lane.b32.xlu0 %v2081, 120
        %v2181 = vpop.permute.xlu0 %2180
        %2182 = vrot.lane.b32.xlu0 %v2082, 120
        %v2183 = vpop.permute.xlu0 %2182
        %2184 = vrot.lane.b32.xlu0 %v2083, 120
        %v2185 = vpop.permute.xlu0 %2184
        %2186 = vrot.lane.b32.xlu0 %v2084, 120
        %v2187 = vpop.permute.xlu0 %2186
        %2188 = vrot.lane.b32.xlu0 %v2085, 120
        %v2189 = vpop.permute.xlu0 %2188
        %2190 = vrot.lane.b32.xlu0 %v2086, 120
        %v2191 = vpop.permute.xlu0 %2190
        %2192 = vrot.lane.b32.xlu0 %v2087, 120
        %v2193 = vpop.permute.xlu0 %2192
        %2194 = vrot.lane.b32.xlu0 %v2088, 120
        %v2195 = vpop.permute.xlu0 %2194
        %2196 = vrot.lane.b32.xlu0 %v2089, 120
        %v2197 = vpop.permute.xlu0 %2196
        %2198 = vrot.lane.b32.xlu0 %v2090, 120
        %v2199 = vpop.permute.xlu0 %2198
        %2200 = vrot.lane.b32.xlu0 %v2091, 120
        %v2201 = vpop.permute.xlu0 %2200
        %2202 = vrot.lane.b32.xlu0 %v2092, 120
        %v2203 = vpop.permute.xlu0 %2202
        %2204 = vrot.lane.b32.xlu0 %v2093, 120
        %v2205 = vpop.permute.xlu0 %2204
        %2206 = vrot.lane.b32.xlu0 %v2094, 120
        %v2207 = vpop.permute.xlu0 %2206
        %2208 = vrot.lane.b32.xlu0 %v2095, 120
        %v2209 = vpop.permute.xlu0 %2208
        %2210 = vrot.lane.b32.xlu0 %v2096, 120
        %v2211 = vpop.permute.xlu0 %2210
        %2212 = vrot.lane.b32.xlu0 %v2097, 120
        %v2213 = vpop.permute.xlu0 %2212
        %2214 = vrot.lane.b32.xlu0 %v2098, 120
        %v2215 = vpop.permute.xlu0 %2214
        %2216 = vrot.lane.b32.xlu0 %v2099, 120
        %v2217 = vpop.permute.xlu0 %2216
        %2218 = vrot.lane.b32.xlu0 %v2100, 120
        %v2219 = vpop.permute.xlu0 %2218
        %2220 = vrot.lane.b32.xlu0 %v2101, 120
        %v2221 = vpop.permute.xlu0 %2220
        %2222 = vrot.lane.b32.xlu0 %v2102, 120
        %v2223 = vpop.permute.xlu0 %2222
        %2224 = vrot.lane.b32.xlu0 %v2103, 120
        %v2225 = vpop.permute.xlu0 %2224
        %2226 = vrot.lane.b32.xlu0 %v2104, 120
        %v2227 = vpop.permute.xlu0 %2226
        %2228 = vrot.lane.b32.xlu0 %v2105, 120
        %v2229 = vpop.permute.xlu0 %2228
        %2230 = vrot.lane.b32.xlu0 %v2106, 120
        %v2231 = vpop.permute.xlu0 %2230
        %2232 = vrot.lane.b32.xlu0 %v2107, 120
        %v2233 = vpop.permute.xlu0 %2232
        %2234 = vrot.lane.b32.xlu0 %v2108, 120
        %v2235 = vpop.permute.xlu0 %2234
        %2236 = vrot.lane.b32.xlu0 %v2109, 120
        %v2237 = vpop.permute.xlu0 %2236
        %2238 = vrot.lane.b32.xlu0 %v2110, 120
        %v2239 = vpop.permute.xlu0 %2238
        %2272 = vst.msk [vmem:[%s274] sm:$0xf] %vm2143, %v2177
        %2273 = vst.msk [vmem:[%s274 + $0x4] sm:$0xf] %vm2143, %v2179
        %2274 = vst.msk [vmem:[%s274 + $0x8] sm:$0xf] %vm2143, %v2181
        %2275 = vst.msk [vmem:[%s274 + $0xc] sm:$0xf] %vm2143, %v2183
        %2276 = vst.msk [vmem:[%s274 + $0x10] sm:$0xf] %vm2143, %v2185
        %2277 = vst.msk [vmem:[%s274 + $0x14] sm:$0xf] %vm2143, %v2187
        %2278 = vst.msk [vmem:[%s274 + $0x18] sm:$0xf] %vm2143, %v2189
        %2279 = vst.msk [vmem:[%s274 + $0x1c] sm:$0xf] %vm2143, %v2191
        %2280 = vst.msk [vmem:[%s274 + $0x20] sm:$0xf] %vm2143, %v2193
        %2281 = vst.msk [vmem:[%s274 + $0x24] sm:$0xf] %vm2143, %v2195
        %2282 = vst.msk [vmem:[%s274 + $0x28] sm:$0xf] %vm2143, %v2197
        %2283 = vst.msk [vmem:[%s274 + $0x2c] sm:$0xf] %vm2143, %v2199
        %2284 = vst.msk [vmem:[%s274 + $0x30] sm:$0xf] %vm2143, %v2201
        %2285 = vst.msk [vmem:[%s274 + $0x34] sm:$0xf] %vm2143, %v2203
        %2286 = vst.msk [vmem:[%s274 + $0x38] sm:$0xf] %vm2143, %v2205
        %2287 = vst.msk [vmem:[%s274 + $0x3c] sm:$0xf] %vm2143, %v2207
        %2288 = vst.msk [vmem:[%s274 + $0x40] sm:$0xf] %vm2143, %v2209
        %2289 = vst.msk [vmem:[%s274 + $0x44] sm:$0xf] %vm2143, %v2211
        %2290 = vst.msk [vmem:[%s274 + $0x48] sm:$0xf] %vm2143, %v2213
        %2291 = vst.msk [vmem:[%s274 + $0x4c] sm:$0xf] %vm2143, %v2215
        %2292 = vst.msk [vmem:[%s274 + $0x50] sm:$0xf] %vm2143, %v2217
        %2293 = vst.msk [vmem:[%s274 + $0x54] sm:$0xf] %vm2143, %v2219
        %2294 = vst.msk [vmem:[%s274 + $0x58] sm:$0xf] %vm2143, %v2221
        %2295 = vst.msk [vmem:[%s274 + $0x5c] sm:$0xf] %vm2143, %v2223
        %2296 = vst.msk [vmem:[%s274 + $0x60] sm:$0xf] %vm2143, %v2225
        %2297 = vst.msk [vmem:[%s274 + $0x64] sm:$0xf] %vm2143, %v2227
        %2298 = vst.msk [vmem:[%s274 + $0x68] sm:$0xf] %vm2143, %v2229
        %2299 = vst.msk [vmem:[%s274 + $0x6c] sm:$0xf] %vm2143, %v2231
        %2300 = vst.msk [vmem:[%s274 + $0x70] sm:$0xf] %vm2143, %v2233
        %2301 = vst.msk [vmem:[%s274 + $0x74] sm:$0xf] %vm2143, %v2235
        %2302 = vst.msk [vmem:[%s274 + $0x78] sm:$0xf] %vm2143, %v2237
        %2303 = vst.msk [vmem:[%s274 + $0x7c] sm:$0xf] %vm2143, %v2239
        %p2304 = scmp.lt.s32.totalorder %s21, 1
        %s2305 = scalar_select %p2304, %s21, 1
        %s2306 = smul.addr %s2305, 32
        %s2307 = smul.addr %s2306, 4
        %s2308 = scalar_lea.vmem %s4, %s2307
        %p2309 = scmp.lt.s32.totalorder %s21, 1
        %s2310 = scalar_select %p2309, %s21, 1
        %s2311 = smul.addr %s2310, 32
        %s2312 = smul.addr %s2311, 4
        %s2313 = scalar_lea.vmem %s5, %s2312
        %s2314 = sand.u32 %s170, 1
        %s2315 = scalar_lea.sflag [#allocation5], %s2314
        %s2316 = sand.u32 %s170, 1
        %s2317 = smul.addr %s2316, 2
        %s2318 = scalar_lea.vmem [#allocation4], %s2317
        // Predicated region
        $region37: #{tpu_custom_call.1} parent=35 // pred_check
          %p2319 = pneg %p128
        $region38: #{tpu_custom_call.1} parent=35 // pred_check_branch
          %2321 = sbr.rel (%p2319) target = $region40
        $region39: #{tpu_custom_call.1} parent=35 // pred_region
          _
        $region40: #{tpu_custom_call.1} parent=35 // pred_fallthru
          _
        // Predicated region
        $region41: #{tpu_custom_call.1} parent=35 // pred_check
          %p2322 = pneg %p154
        $region42: #{tpu_custom_call.1} parent=35 // pred_check_branch
          %2324 = sbr.rel (%p2322) target = $region44
        $region43: #{tpu_custom_call.1} parent=35 // pred_region
          _
        $region44: #{tpu_custom_call.1} parent=35 // pred_fallthru
          _
        // Predicated region
        $region45: #{tpu_custom_call.1} parent=35 // pred_check
          %p2325 = pneg %p180
        $region46: #{tpu_custom_call.1} parent=35 // pred_check_branch
          %2327 = sbr.rel (%p2325) target = $region48
        $region47: #{tpu_custom_call.1} parent=35 // pred_region
          %s2329 = ssub.s32 32, 32
          %2330 = vsyncadd %s2315, %s2329
          %s2331 = smul.addr %s21, 32
          %s2332 = scalar_lea.hbm %s6, %s2331
          %s2334 = sshll.u32 %s2318, 4
          %s2335 = int_to_ptr.vmem [resolvable:$true] %s2334
          %2337 = dma.vmem_to_hbm [thread:$0]  %s2335, 32, %s2332, %s2315
        $region48: #{tpu_custom_call.1} parent=35 // pred_fallthru
          _
      $region36: #{tpu_custom_call.1} parent=5 // pred_fallthru
        _
      %p2338 = scmp.le.s32.totalorder 2, %s16
      // Predicated region
      $region49: #{tpu_custom_call.1} parent=5 // pred_check
        %p2339 = pneg %p2338
      $region50: #{tpu_custom_call.1} parent=5 // pred_check_branch
        %2341 = sbr.rel (%p2339) target = $region52
      $region51: #{tpu_custom_call.1} parent=5 // pred_region
        %s2342 = ssub.s32 %s16, 2
        // Predicated region
        $region53: #{tpu_custom_call.1} parent=51 // pred_check
          %p2343 = pneg %p134
        $region54: #{tpu_custom_call.1} parent=51 // pred_check_branch
          %2345 = sbr.rel (%p2343) target = $region56
        $region55: #{tpu_custom_call.1} parent=51 // pred_region
          %p2346 = scmp.lt.s32.totalorder %s22, 1
          %s2347 = scalar_select %p2346, %s22, 1
          %s2348 = smul.addr %s2347, 32
          %s2349 = smul.addr %s2348, 4
          %s2350 = scalar_lea.vmem %s4, %s2349
        $region56: #{tpu_custom_call.1} parent=51 // pred_fallthru
          _
        // Predicated region
        $region57: #{tpu_custom_call.1} parent=51 // pred_check
          %p2351 = pneg %p160
        $region58: #{tpu_custom_call.1} parent=51 // pred_check_branch
          %2353 = sbr.rel (%p2351) target = $region60
        $region59: #{tpu_custom_call.1} parent=51 // pred_region
          %p2354 = scmp.lt.s32.totalorder %s22, 1
          %s2355 = scalar_select %p2354, %s22, 1
          %s2356 = smul.addr %s2355, 32
          %s2357 = smul.addr %s2356, 4
          %s2358 = scalar_lea.vmem %s5, %s2357
        $region60: #{tpu_custom_call.1} parent=51 // pred_fallthru
          _
        // Predicated region
        $region61: #{tpu_custom_call.1} parent=51 // pred_check
          %p2359 = pneg %p186
        $region62: #{tpu_custom_call.1} parent=51 // pred_check_branch
          %2361 = sbr.rel (%p2359) target = $region64
        $region63: #{tpu_custom_call.1} parent=51 // pred_region
          %s2362 = sand.u32 %s171, 1
          %s2363 = scalar_lea.sflag [#allocation5], %s2362
          %s2364 = sand.u32 %s171, 1
          %s2365 = smul.addr %s2364, 2
          %s2366 = scalar_lea.vmem [#allocation4], %s2365
          %2367 = dma.done %s2363, 32
        $region64: #{tpu_custom_call.1} parent=51 // pred_fallthru
          _
      $region52: #{tpu_custom_call.1} parent=5 // pred_fallthru
        _
    $region6: #{tpu_custom_call.1} parent=1 // loop_footer
      %s20 = sadd.s32 1, %s16
    $region7: #{tpu_custom_call.1} parent=1 // loop_footer_branch
      %15 = sbr.rel target = $region3
    $region8: #{tpu_custom_call.1} parent=1 // loop_exit
      _
    %2368 = vsyncpa [#allocation5], 1
    %s2369 = scalar_lea.sflag [#allocation5], 1
    %2370 = vsyncpa %s2369, 1

</llo_original>
